<compile_context>
chip_gen: v7x
topology: tpu7x:2x2x1
jax: 0.10.0
libtpu: 0.0.40
codegen_flags: <defaults>
</compile_context>

<pallas_src>
import jax
import jax.numpy as jnp
from jax.experimental import pallas as pl
from jax.experimental.pallas import tpu as pltpu

# Module hyper-parameters (PyTorch __init__ defaults).
L = 5
POS_SCALE = 0.01
HEADING_SCALE = 1.0
PI = 3.1415927410125732        # float32 pi, same constant as the PyTorch code
_RESEED_FREQ = 3               # recompute exact sin/cos at this frequency index

# Tile sizes (rows of the flattened (N, D) view per grid step).
_TM_MAX = 2048                 # row-major kernel (module path)
_TN_MAX = 8192                 # lane-major kernel (lane-dense path)


def _round_up(a: int, b: int) -> int:
    return ((a + b - 1) // b) * b


def _scale_consts(feat_idx):
    """Per-feature constants from an int32 feature-index array.

    Returns (pi_scale, inv_scale) broadcastable against x.  Matches the
    PyTorch [:, :, :10] / [:, :, 10:] split (features < 10 use pos_scale).
    """
    is_pos = feat_idx < 10
    scale = jnp.where(is_pos, POS_SCALE, HEADING_SCALE).astype(jnp.float32)
    pi_scale = jnp.float32(PI) * scale          # fold PI into the constant
    inv_scale = jnp.float32(1.0) / scale        # matches the reference's divide
    return pi_scale, inv_scale


def _posmap_compute(x, pi_scale, inv_scale, store, out_dtype):
    """Shared compute body.  `store(k, value)` writes part k of 2L+1 parts."""
    store(0, x.astype(out_dtype))               # identity pass-through
    theta = x * pi_scale
    s = jnp.sin(theta)                          # base-frequency transcendentals
    c = jnp.cos(theta)
    for i in range(L):
        store(2 * i + 1, (s * inv_scale).astype(out_dtype))
        store(2 * i + 2, (c * inv_scale).astype(out_dtype))
        nxt = i + 1
        if nxt < L:
            if nxt == _RESEED_FREQ:
                # Exact re-seed: caps recurrence error amplification (~free,
                # the EUP has slack in this DMA/store-bound kernel).
                ang = jnp.float32(float(2 ** nxt)) * theta
                s = jnp.sin(ang)
                c = jnp.cos(ang)
            else:
                # sin(2a)=2 sin a cos a, cos(2a)=2 cos^2 a - 1  (pure VPU)
                s, c = 2.0 * s * c, 2.0 * c * c - 1.0


# ---------------------------------------------------------------------------
# Kernels
# ---------------------------------------------------------------------------

def _posmap_kernel_rows(x_ref, o_ref):
    """Row-major: x_ref (TM, D) -> o_ref (TM, D*(2L+1)).  Module layout."""
    x = x_ref[...].astype(jnp.float32)
    D = x.shape[1]
    feat = jax.lax.broadcasted_iota(jnp.int32, (1, D), 1)
    pi_scale, inv_scale = _scale_consts(feat)

    def store(k, v):
        o_ref[:, k * D:(k + 1) * D] = v         # static lane-window store

    _posmap_compute(x, pi_scale, inv_scale, store, o_ref.dtype)


def _posmap_kernel_lanes(x_ref, o_ref):
    """Lane-major: x_ref (D, TN) -> o_ref (D*(2L+1), TN).  Lane-dense compute.

    Note: keep D a multiple of 8 so the sublane part-slices stay aligned.
    """
    x = x_ref[...].astype(jnp.float32)
    D = x.shape[0]
    feat = jax.lax.broadcasted_iota(jnp.int32, (D, 1), 0)
    pi_scale, inv_scale = _scale_consts(feat)

    def store(k, v):
        o_ref[k * D:(k + 1) * D, :] = v         # aligned sublane-window store

    _posmap_compute(x, pi_scale, inv_scale, store, o_ref.dtype)


# ---------------------------------------------------------------------------
# pallas_call wrappers
# ---------------------------------------------------------------------------

def _cost(n_rows, d, itemsize):
    out_dim = d * (2 * L + 1)
    return pl.CostEstimate(
        flops=25 * n_rows * d,
        transcendentals=4 * n_rows * d,
        bytes_accessed=(d + out_dim) * n_rows * itemsize,
    )


def positional_mapping_rows(x2d: jax.Array) -> jax.Array:
    """Row-major entry point: (N, D) -> (N, D*(2L+1)).  No transposes."""
    N, D = x2d.shape
    out_dim = D * (2 * L + 1)

    if N <= 8:
        tm = N                                   # single tiny block (full extent)
    elif N <= 2 * _TM_MAX:
        # >= 2 grid steps so both v7x TensorCores get work.
        tm = min(_round_up(pl.cdiv(N, 2), 8), _TM_MAX)
    else:
        tm = _TM_MAX
    grid = (pl.cdiv(N, tm),)

    return pl.pallas_call(
        _posmap_kernel_rows,
        out_shape=jax.ShapeDtypeStruct((N, out_dim), x2d.dtype),
        grid=grid,
        in_specs=[pl.BlockSpec((tm, D), lambda i: (i, 0))],
        out_specs=pl.BlockSpec((tm, out_dim), lambda i: (i, 0)),
        compiler_params=pltpu.CompilerParams(
            dimension_semantics=("parallel",)),
        cost_estimate=_cost(N, D, x2d.dtype.itemsize),
    )(x2d)


def positional_mapping_lane_major(xt: jax.Array) -> jax.Array:
    """Lane-major entry point: (D, N) -> (D*(2L+1), N).

    Use this when activations are already lane-major; it runs at full lane
    occupancy with dense, unmasked stores.
    """
    D, N = xt.shape
    out_dim = D * (2 * L + 1)

    if N <= 128:
        tn = N                                   # single block (full extent)
    elif N <= 2 * _TN_MAX:
        tn = min(_round_up(pl.cdiv(N, 2), 128), _TN_MAX)   # >= 2 steps (v7x)
    else:
        tn = _TN_MAX
    grid = (pl.cdiv(N, tn),)

    return pl.pallas_call(
        _posmap_kernel_lanes,
        out_shape=jax.ShapeDtypeStruct((out_dim, N), xt.dtype),
        grid=grid,
        in_specs=[pl.BlockSpec((D, tn), lambda j: (0, j))],
        out_specs=pl.BlockSpec((out_dim, tn), lambda j: (0, j)),
        compiler_params=pltpu.CompilerParams(
            dimension_semantics=("parallel",)),
        cost_estimate=_cost(N, D, xt.dtype.itemsize),
    )(xt)


def positional_mapping(x: jax.Array) -> jax.Array:
    """Module-compatible forward: x (B, S, D) -> (B, S, D*(2L+1)).

    Leading-dim reshape only (no data movement); the row-major kernel writes
    the output in its final layout, so there is no extra HBM pass.
    """
    if L == 0:
        return x
    B, S, D = x.shape
    out_dim = D * (2 * L + 1)
    x2d = x.reshape(B * S, D)
    try:
        out2d = positional_mapping_rows(x2d)
    except Exception:
        # Safety net only: if the row-major lane-window stores are ever
        # rejected by the Mosaic lowering on some toolchain, fall back to the
        # lane-major kernel + XLA transposes (correct, costs one extra HBM
        # pass of the 11x output).
        out2d = positional_mapping_lane_major(x2d.T).T
    return out2d.reshape(B, S, out_dim)


# ---------------------------------------------------------------------------
# Reference + self-test
# ---------------------------------------------------------------------------

def _reference(x: jnp.ndarray) -> jnp.ndarray:
    """Pure-JAX reference mirroring the PyTorch forward exactly."""
    if L == 0:
        return x
    D = x.shape[-1]
    scale = jnp.where(jnp.arange(D) < 10, POS_SCALE, HEADING_SCALE).astype(x.dtype)
    x_scale = x * scale
    h = [x]
    for i in range(L):
        h.append(jnp.sin((2.0 ** i) * PI * x_scale) / scale)
        h.append(jnp.cos((2.0 ** i) * PI * x_scale) / scale)
    return jnp.concatenate(h, axis=-1)


def _check(x):
    out = jax.block_until_ready(positional_mapping(x))
    ref = _reference(x)
    B, S, D = x.shape
    assert out.shape == (B, S, D * (2 * L + 1)), out.shape
    # Identity slice must be bit-exact (f32 in, f32 out).
    assert jnp.array_equal(out[..., :D], x), "identity slice mismatch"
    # Sin/cos parts: reseeded double-angle recurrence keeps the max abs error
    # around ~1e-4 (outputs reach |100| due to the 1/pos_scale factor).
    err = float(jnp.max(jnp.abs(out - ref)))
    assert err <= 5e-3, f"max abs err {err}"


if __name__ == "__main__":
    D = 16  # 16 features: first 10 "position" (x0.01), last 6 "heading" (x1.0)
    key = jax.random.PRNGKey(0)
    k0, k1 = jax.random.split(key)

    # Small case: N = 16 rows -> split into 2 blocks of 8 (v7x-friendly grid).
    x_small = jax.random.normal(k0, (2, 8, D), dtype=jnp.float32)
    _check(x_small)

    # Bigger case: N = 2048 rows -> 2 row blocks of 1024.
    x_big = jax.random.normal(k1, (4, 512, D), dtype=jnp.float32)
    _check(x_big)

    # Lane-major variant (for lane-major callers): compare against reference.
    xt = x_big.reshape(-1, D).T                               # (D, N)
    out_lm = jax.block_until_ready(positional_mapping_lane_major(xt))
    ref_lm = _reference(x_big).reshape(-1, D * (2 * L + 1)).T
    assert out_lm.shape == ref_lm.shape
    assert float(jnp.max(jnp.abs(out_lm - ref_lm))) <= 5e-3

    print("KERNEL_OK")
</pallas_src>

<mosaic_0001>
module attributes {stable_mosaic.version = 11 : i64} {
  func.func @_posmap_kernel_rows(%arg0: i32, %arg1: memref<8x16xf32, #tpu.memory_space<vmem>>, %arg2: memref<8x176xf32, #tpu.memory_space<vmem>>) attributes {dimension_semantics = [#tpu.dimension_semantics<parallel>], iteration_bounds = array<i64: 2>, scalar_prefetch = 0 : i64, scratch_operands = 0 : i64, tpu.core_type = #tpu.core_type<tc>, window_params = [{transform_indices = @transform_0, window_bounds = array<i64: 8, 16>}, {transform_indices = @transform_1, window_bounds = array<i64: 8, 176>}]} {
    %c0 = arith.constant 0 : index
    %c0_0 = arith.constant 0 : index
    %0 = vector.load %arg1[%c0, %c0_0] : memref<8x16xf32, #tpu.memory_space<vmem>>, vector<8x16xf32>
    %1 = tpu.iota {dimensions = array<i32: 1>} : vector<1x16xi32>
    %c10_i32 = arith.constant 10 : i32
    %2 = vector.broadcast %c10_i32 : i32 to vector<1x16xi32>
    %3 = arith.cmpi slt, %1, %2 : vector<1x16xi32>
    %cst = arith.constant 0.00999999977 : f32
    %cst_1 = arith.constant 1.000000e+00 : f32
    %4 = vector.broadcast %cst : f32 to vector<1x16xf32>
    %5 = vector.broadcast %cst_1 : f32 to vector<1x16xf32>
    %6 = arith.select %3, %4, %5 : vector<1x16xi1>, vector<1x16xf32>
    %cst_2 = arith.constant 3.14159274 : f32
    %7 = vector.broadcast %cst_2 : f32 to vector<1x16xf32>
    %8 = arith.mulf %7, %6 : vector<1x16xf32>
    %cst_3 = arith.constant 1.000000e+00 : f32
    %9 = vector.broadcast %cst_3 : f32 to vector<1x16xf32>
    %10 = arith.divf %9, %6 : vector<1x16xf32>
    %c0_4 = arith.constant 0 : index
    %c0_5 = arith.constant 0 : index
    %11 = vector.load %arg2[%c0_4, %c0_5] : memref<8x176xf32, #tpu.memory_space<vmem>>, vector<8x16xf32>
    tpu.vector_store %arg2[%c0_4, %c0_5], %0 {strides = array<i32>} : memref<8x176xf32, #tpu.memory_space<vmem>>, vector<8x16xf32>,
    %12 = vector.broadcast %8 : vector<1x16xf32> to vector<8x16xf32>
    %13 = arith.mulf %0, %12 : vector<8x16xf32>
    %14 = math.sin %13 : vector<8x16xf32>
    %15 = math.cos %13 : vector<8x16xf32>
    %16 = vector.broadcast %10 : vector<1x16xf32> to vector<8x16xf32>
    %17 = arith.mulf %14, %16 : vector<8x16xf32>
    %c0_6 = arith.constant 0 : index
    %c16 = arith.constant 16 : index
    %18 = vector.load %arg2[%c0_6, %c16] : memref<8x176xf32, #tpu.memory_space<vmem>>, vector<8x16xf32>
    tpu.vector_store %arg2[%c0_6, %c16], %17 {strides = array<i32>} : memref<8x176xf32, #tpu.memory_space<vmem>>, vector<8x16xf32>,
    %19 = vector.broadcast %10 : vector<1x16xf32> to vector<8x16xf32>
    %20 = arith.mulf %15, %19 : vector<8x16xf32>
    %c0_7 = arith.constant 0 : index
    %c32 = arith.constant 32 : index
    %21 = vector.load %arg2[%c0_7, %c32] : memref<8x176xf32, #tpu.memory_space<vmem>>, vector<8x16xf32>
    tpu.vector_store %arg2[%c0_7, %c32], %20 {strides = array<i32>} : memref<8x176xf32, #tpu.memory_space<vmem>>, vector<8x16xf32>,
    %cst_8 = arith.constant 2.000000e+00 : f32
    %22 = vector.broadcast %cst_8 : f32 to vector<8x16xf32>
    %23 = arith.mulf %22, %14 : vector<8x16xf32>
    %24 = arith.mulf %23, %15 : vector<8x16xf32>
    %cst_9 = arith.constant 2.000000e+00 : f32
    %25 = vector.broadcast %cst_9 : f32 to vector<8x16xf32>
    %26 = arith.mulf %25, %15 : vector<8x16xf32>
    %27 = arith.mulf %26, %15 : vector<8x16xf32>
    %cst_10 = arith.constant 1.000000e+00 : f32
    %28 = vector.broadcast %cst_10 : f32 to vector<8x16xf32>
    %29 = arith.subf %27, %28 : vector<8x16xf32>
    %30 = vector.broadcast %10 : vector<1x16xf32> to vector<8x16xf32>
    %31 = arith.mulf %24, %30 : vector<8x16xf32>
    %c0_11 = arith.constant 0 : index
    %c48 = arith.constant 48 : index
    %32 = vector.load %arg2[%c0_11, %c48] : memref<8x176xf32, #tpu.memory_space<vmem>>, vector<8x16xf32>
    tpu.vector_store %arg2[%c0_11, %c48], %31 {strides = array<i32>} : memref<8x176xf32, #tpu.memory_space<vmem>>, vector<8x16xf32>,
    %33 = vector.broadcast %10 : vector<1x16xf32> to vector<8x16xf32>
    %34 = arith.mulf %29, %33 : vector<8x16xf32>
    %c0_12 = arith.constant 0 : index
    %c64 = arith.constant 64 : index
    %35 = vector.load %arg2[%c0_12, %c64] : memref<8x176xf32, #tpu.memory_space<vmem>>, vector<8x16xf32>
    tpu.vector_store %arg2[%c0_12, %c64], %34 {strides = array<i32>} : memref<8x176xf32, #tpu.memory_space<vmem>>, vector<8x16xf32>,
    %cst_13 = arith.constant 2.000000e+00 : f32
    %36 = vector.broadcast %cst_13 : f32 to vector<8x16xf32>
    %37 = arith.mulf %36, %24 : vector<8x16xf32>
    %38 = arith.mulf %37, %29 : vector<8x16xf32>
    %cst_14 = arith.constant 2.000000e+00 : f32
    %39 = vector.broadcast %cst_14 : f32 to vector<8x16xf32>
    %40 = arith.mulf %39, %29 : vector<8x16xf32>
    %41 = arith.mulf %40, %29 : vector<8x16xf32>
    %cst_15 = arith.constant 1.000000e+00 : f32
    %42 = vector.broadcast %cst_15 : f32 to vector<8x16xf32>
    %43 = arith.subf %41, %42 : vector<8x16xf32>
    %44 = vector.broadcast %10 : vector<1x16xf32> to vector<8x16xf32>
    %45 = arith.mulf %38, %44 : vector<8x16xf32>
    %c0_16 = arith.constant 0 : index
    %c80 = arith.constant 80 : index
    %46 = vector.load %arg2[%c0_16, %c80] : memref<8x176xf32, #tpu.memory_space<vmem>>, vector<8x16xf32>
    tpu.vector_store %arg2[%c0_16, %c80], %45 {strides = array<i32>} : memref<8x176xf32, #tpu.memory_space<vmem>>, vector<8x16xf32>,
    %47 = vector.broadcast %10 : vector<1x16xf32> to vector<8x16xf32>
    %48 = arith.mulf %43, %47 : vector<8x16xf32>
    %c0_17 = arith.constant 0 : index
    %c96 = arith.constant 96 : index
    %49 = vector.load %arg2[%c0_17, %c96] : memref<8x176xf32, #tpu.memory_space<vmem>>, vector<8x16xf32>
    tpu.vector_store %arg2[%c0_17, %c96], %48 {strides = array<i32>} : memref<8x176xf32, #tpu.memory_space<vmem>>, vector<8x16xf32>,
    %cst_18 = arith.constant 8.000000e+00 : f32
    %50 = vector.broadcast %cst_18 : f32 to vector<8x16xf32>
    %51 = arith.mulf %50, %13 : vector<8x16xf32>
    %52 = math.sin %51 : vector<8x16xf32>
    %53 = math.cos %51 : vector<8x16xf32>
    %54 = vector.broadcast %10 : vector<1x16xf32> to vector<8x16xf32>
    %55 = arith.mulf %52, %54 : vector<8x16xf32>
    %c0_19 = arith.constant 0 : index
    %c112 = arith.constant 112 : index
    %56 = vector.load %arg2[%c0_19, %c112] : memref<8x176xf32, #tpu.memory_space<vmem>>, vector<8x16xf32>
    tpu.vector_store %arg2[%c0_19, %c112], %55 {strides = array<i32>} : memref<8x176xf32, #tpu.memory_space<vmem>>, vector<8x16xf32>,
    %57 = vector.broadcast %10 : vector<1x16xf32> to vector<8x16xf32>
    %58 = arith.mulf %53, %57 : vector<8x16xf32>
    %c0_20 = arith.constant 0 : index
    %c128 = arith.constant 128 : index
    %59 = vector.load %arg2[%c0_20, %c128] : memref<8x176xf32, #tpu.memory_space<vmem>>, vector<8x16xf32>
    tpu.vector_store %arg2[%c0_20, %c128], %58 {strides = array<i32>} : memref<8x176xf32, #tpu.memory_space<vmem>>, vector<8x16xf32>,
    %cst_21 = arith.constant 2.000000e+00 : f32
    %60 = vector.broadcast %cst_21 : f32 to vector<8x16xf32>
    %61 = arith.mulf %60, %52 : vector<8x16xf32>
    %62 = arith.mulf %61, %53 : vector<8x16xf32>
    %cst_22 = arith.constant 2.000000e+00 : f32
    %63 = vector.broadcast %cst_22 : f32 to vector<8x16xf32>
    %64 = arith.mulf %63, %53 : vector<8x16xf32>
    %65 = arith.mulf %64, %53 : vector<8x16xf32>
    %cst_23 = arith.constant 1.000000e+00 : f32
    %66 = vector.broadcast %cst_23 : f32 to vector<8x16xf32>
    %67 = arith.subf %65, %66 : vector<8x16xf32>
    %68 = vector.broadcast %10 : vector<1x16xf32> to vector<8x16xf32>
    %69 = arith.mulf %62, %68 : vector<8x16xf32>
    %c0_24 = arith.constant 0 : index
    %c144 = arith.constant 144 : index
    %70 = vector.load %arg2[%c0_24, %c144] : memref<8x176xf32, #tpu.memory_space<vmem>>, vector<8x16xf32>
    tpu.vector_store %arg2[%c0_24, %c144], %69 {strides = array<i32>} : memref<8x176xf32, #tpu.memory_space<vmem>>, vector<8x16xf32>,
    %71 = vector.broadcast %10 : vector<1x16xf32> to vector<8x16xf32>
    %72 = arith.mulf %67, %71 : vector<8x16xf32>
    %c0_25 = arith.constant 0 : index
    %c160 = arith.constant 160 : index
    %73 = vector.load %arg2[%c0_25, %c160] : memref<8x176xf32, #tpu.memory_space<vmem>>, vector<8x16xf32>
    tpu.vector_store %arg2[%c0_25, %c160], %72 {strides = array<i32>} : memref<8x176xf32, #tpu.memory_space<vmem>>, vector<8x16xf32>,
    return
  }
  func.func @transform_0(%arg0: i32) -> (i32, i32) {
    %c0_i32 = arith.constant 0 : i32
    %c0_i32_0 = arith.constant 0 : i32
    return %arg0, %c0_i32 : i32, i32
  }
  func.func @transform_1(%arg0: i32) -> (i32, i32) {
    %c0_i32 = arith.constant 0 : i32
    %c0_i32_0 = arith.constant 0 : i32
    return %arg0, %c0_i32 : i32, i32
  }
}

module attributes {stable_mosaic.version = 11 : i64} {
  func.func @_posmap_kernel_lanes(%arg0: i32, %arg1: memref<16x16xf32, #tpu.memory_space<vmem>>, %arg2: memref<176x16xf32, #tpu.memory_space<vmem>>) attributes {dimension_semantics = [#tpu.dimension_semantics<parallel>], iteration_bounds = array<i64: 1>, scalar_prefetch = 0 : i64, scratch_operands = 0 : i64, tpu.core_type = #tpu.core_type<tc>, window_params = [{transform_indices = @transform_0, window_bounds = array<i64: 16, 16>}, {transform_indices = @transform_1, window_bounds = array<i64: 176, 16>}]} {
    %c0 = arith.constant 0 : index
    %c0_0 = arith.constant 0 : index
    %0 = vector.load %arg1[%c0, %c0_0] : memref<16x16xf32, #tpu.memory_space<vmem>>, vector<16x16xf32>
    %1 = tpu.iota {dimensions = array<i32: 0>} : vector<16x1xi32>
    %c10_i32 = arith.constant 10 : i32
    %2 = vector.broadcast %c10_i32 : i32 to vector<16x1xi32>
    %3 = arith.cmpi slt, %1, %2 : vector<16x1xi32>
    %cst = arith.constant 0.00999999977 : f32
    %cst_1 = arith.constant 1.000000e+00 : f32
    %4 = vector.broadcast %cst : f32 to vector<16x1xf32>
    %5 = vector.broadcast %cst_1 : f32 to vector<16x1xf32>
    %6 = arith.select %3, %4, %5 : vector<16x1xi1>, vector<16x1xf32>
    %cst_2 = arith.constant 3.14159274 : f32
    %7 = vector.broadcast %cst_2 : f32 to vector<16x1xf32>
    %8 = arith.mulf %7, %6 : vector<16x1xf32>
    %cst_3 = arith.constant 1.000000e+00 : f32
    %9 = vector.broadcast %cst_3 : f32 to vector<16x1xf32>
    %10 = arith.divf %9, %6 : vector<16x1xf32>
    %c0_4 = arith.constant 0 : index
    %c0_5 = arith.constant 0 : index
    %11 = vector.load %arg2[%c0_4, %c0_5] : memref<176x16xf32, #tpu.memory_space<vmem>>, vector<16x16xf32>
    tpu.vector_store %arg2[%c0_4, %c0_5], %0 {strides = array<i32>} : memref<176x16xf32, #tpu.memory_space<vmem>>, vector<16x16xf32>,
    %12 = vector.broadcast %8 : vector<16x1xf32> to vector<16x16xf32>
    %13 = arith.mulf %0, %12 : vector<16x16xf32>
    %14 = math.sin %13 : vector<16x16xf32>
    %15 = math.cos %13 : vector<16x16xf32>
    %16 = vector.broadcast %10 : vector<16x1xf32> to vector<16x16xf32>
    %17 = arith.mulf %14, %16 : vector<16x16xf32>
    %c16 = arith.constant 16 : index
    %c0_6 = arith.constant 0 : index
    %18 = vector.load %arg2[%c16, %c0_6] : memref<176x16xf32, #tpu.memory_space<vmem>>, vector<16x16xf32>
    tpu.vector_store %arg2[%c16, %c0_6], %17 {strides = array<i32>} : memref<176x16xf32, #tpu.memory_space<vmem>>, vector<16x16xf32>,
    %19 = vector.broadcast %10 : vector<16x1xf32> to vector<16x16xf32>
    %20 = arith.mulf %15, %19 : vector<16x16xf32>
    %c32 = arith.constant 32 : index
    %c0_7 = arith.constant 0 : index
    %21 = vector.load %arg2[%c32, %c0_7] : memref<176x16xf32, #tpu.memory_space<vmem>>, vector<16x16xf32>
    tpu.vector_store %arg2[%c32, %c0_7], %20 {strides = array<i32>} : memref<176x16xf32, #tpu.memory_space<vmem>>, vector<16x16xf32>,
    %cst_8 = arith.constant 2.000000e+00 : f32
    %22 = vector.broadcast %cst_8 : f32 to vector<16x16xf32>
    %23 = arith.mulf %22, %14 : vector<16x16xf32>
    %24 = arith.mulf %23, %15 : vector<16x16xf32>
    %cst_9 = arith.constant 2.000000e+00 : f32
    %25 = vector.broadcast %cst_9 : f32 to vector<16x16xf32>
    %26 = arith.mulf %25, %15 : vector<16x16xf32>
    %27 = arith.mulf %26, %15 : vector<16x16xf32>
    %cst_10 = arith.constant 1.000000e+00 : f32
    %28 = vector.broadcast %cst_10 : f32 to vector<16x16xf32>
    %29 = arith.subf %27, %28 : vector<16x16xf32>
    %30 = vector.broadcast %10 : vector<16x1xf32> to vector<16x16xf32>
    %31 = arith.mulf %24, %30 : vector<16x16xf32>
    %c48 = arith.constant 48 : index
    %c0_11 = arith.constant 0 : index
    %32 = vector.load %arg2[%c48, %c0_11] : memref<176x16xf32, #tpu.memory_space<vmem>>, vector<16x16xf32>
    tpu.vector_store %arg2[%c48, %c0_11], %31 {strides = array<i32>} : memref<176x16xf32, #tpu.memory_space<vmem>>, vector<16x16xf32>,
    %33 = vector.broadcast %10 : vector<16x1xf32> to vector<16x16xf32>
    %34 = arith.mulf %29, %33 : vector<16x16xf32>
    %c64 = arith.constant 64 : index
    %c0_12 = arith.constant 0 : index
    %35 = vector.load %arg2[%c64, %c0_12] : memref<176x16xf32, #tpu.memory_space<vmem>>, vector<16x16xf32>
    tpu.vector_store %arg2[%c64, %c0_12], %34 {strides = array<i32>} : memref<176x16xf32, #tpu.memory_space<vmem>>, vector<16x16xf32>,
    %cst_13 = arith.constant 2.000000e+00 : f32
    %36 = vector.broadcast %cst_13 : f32 to vector<16x16xf32>
    %37 = arith.mulf %36, %24 : vector<16x16xf32>
    %38 = arith.mulf %37, %29 : vector<16x16xf32>
    %cst_14 = arith.constant 2.000000e+00 : f32
    %39 = vector.broadcast %cst_14 : f32 to vector<16x16xf32>
    %40 = arith.mulf %39, %29 : vector<16x16xf32>
    %41 = arith.mulf %40, %29 : vector<16x16xf32>
    %cst_15 = arith.constant 1.000000e+00 : f32
    %42 = vector.broadcast %cst_15 : f32 to vector<16x16xf32>
    %43 = arith.subf %41, %42 : vector<16x16xf32>
    %44 = vector.broadcast %10 : vector<16x1xf32> to vector<16x16xf32>
    %45 = arith.mulf %38, %44 : vector<16x16xf32>
    %c80 = arith.constant 80 : index
    %c0_16 = arith.constant 0 : index
    %46 = vector.load %arg2[%c80, %c0_16] : memref<176x16xf32, #tpu.memory_space<vmem>>, vector<16x16xf32>
    tpu.vector_store %arg2[%c80, %c0_16], %45 {strides = array<i32>} : memref<176x16xf32, #tpu.memory_space<vmem>>, vector<16x16xf32>,
    %47 = vector.broadcast %10 : vector<16x1xf32> to vector<16x16xf32>
    %48 = arith.mulf %43, %47 : vector<16x16xf32>
    %c96 = arith.constant 96 : index
    %c0_17 = arith.constant 0 : index
    %49 = vector.load %arg2[%c96, %c0_17] : memref<176x16xf32, #tpu.memory_space<vmem>>, vector<16x16xf32>
    tpu.vector_store %arg2[%c96, %c0_17], %48 {strides = array<i32>} : memref<176x16xf32, #tpu.memory_space<vmem>>, vector<16x16xf32>,
    %cst_18 = arith.constant 8.000000e+00 : f32
    %50 = vector.broadcast %cst_18 : f32 to vector<16x16xf32>
    %51 = arith.mulf %50, %13 : vector<16x16xf32>
    %52 = math.sin %51 : vector<16x16xf32>
    %53 = math.cos %51 : vector<16x16xf32>
    %54 = vector.broadcast %10 : vector<16x1xf32> to vector<16x16xf32>
    %55 = arith.mulf %52, %54 : vector<16x16xf32>
    %c112 = arith.constant 112 : index
    %c0_19 = arith.constant 0 : index
    %56 = vector.load %arg2[%c112, %c0_19] : memref<176x16xf32, #tpu.memory_space<vmem>>, vector<16x16xf32>
    tpu.vector_store %arg2[%c112, %c0_19], %55 {strides = array<i32>} : memref<176x16xf32, #tpu.memory_space<vmem>>, vector<16x16xf32>,
    %57 = vector.broadcast %10 : vector<16x1xf32> to vector<16x16xf32>
    %58 = arith.mulf %53, %57 : vector<16x16xf32>
    %c128 = arith.constant 128 : index
    %c0_20 = arith.constant 0 : index
    %59 = vector.load %arg2[%c128, %c0_20] : memref<176x16xf32, #tpu.memory_space<vmem>>, vector<16x16xf32>
    tpu.vector_store %arg2[%c128, %c0_20], %58 {strides = array<i32>} : memref<176x16xf32, #tpu.memory_space<vmem>>, vector<16x16xf32>,
    %cst_21 = arith.constant 2.000000e+00 : f32
    %60 = vector.broadcast %cst_21 : f32 to vector<16x16xf32>
    %61 = arith.mulf %60, %52 : vector<16x16xf32>
    %62 = arith.mulf %61, %53 : vector<16x16xf32>
    %cst_22 = arith.constant 2.000000e+00 : f32
    %63 = vector.broadcast %cst_22 : f32 to vector<16x16xf32>
    %64 = arith.mulf %63, %53 : vector<16x16xf32>
    %65 = arith.mulf %64, %53 : vector<16x16xf32>
    %cst_23 = arith.constant 1.000000e+00 : f32
    %66 = vector.broadcast %cst_23 : f32 to vector<16x16xf32>
    %67 = arith.subf %65, %66 : vector<16x16xf32>
    %68 = vector.broadcast %10 : vector<16x1xf32> to vector<16x16xf32>
    %69 = arith.mulf %62, %68 : vector<16x16xf32>
    %c144 = arith.constant 144 : index
    %c0_24 = arith.constant 0 : index
    %70 = vector.load %arg2[%c144, %c0_24] : memref<176x16xf32, #tpu.memory_space<vmem>>, vector<16x16xf32>
    tpu.vector_store %arg2[%c144, %c0_24], %69 {strides = array<i32>} : memref<176x16xf32, #tpu.memory_space<vmem>>, vector<16x16xf32>,
    %71 = vector.broadcast %10 : vector<16x1xf32> to vector<16x16xf32>
    %72 = arith.mulf %67, %71 : vector<16x16xf32>
    %c160 = arith.constant 160 : index
    %c0_25 = arith.constant 0 : index
    %73 = vector.load %arg2[%c160, %c0_25] : memref<176x16xf32, #tpu.memory_space<vmem>>, vector<16x16xf32>
    tpu.vector_store %arg2[%c160, %c0_25], %72 {strides = array<i32>} : memref<176x16xf32, #tpu.memory_space<vmem>>, vector<16x16xf32>,
    return
  }
  func.func @transform_0(%arg0: i32) -> (i32, i32) {
    %c0_i32 = arith.constant 0 : i32
    %c0_i32_0 = arith.constant 0 : i32
    return %c0_i32, %arg0 : i32, i32
  }
  func.func @transform_1(%arg0: i32) -> (i32, i32) {
    %c0_i32 = arith.constant 0 : i32
    %c0_i32_0 = arith.constant 0 : i32
    return %c0_i32, %arg0 : i32, i32
  }
}

</mosaic_0001>

<llo_original>
// kernel: tpu_custom_call.1
$region0: #{tpu_custom_call.1}
  #allocation0 [shape = 'u32[]', space=smem, size = 0x4, offset = 0x4, fixed_abs, tag = 'smem constant byte address 0x4 - core index']
  #allocation1 [shape = 'u32[144,128]{1,0:T(1,128)}', space=vmem, size = 0x12000, scoped, tag = 'internal scratch']
  %s0 = inlined_call_operand.hbm [shape: f32[16,16], index: 0, kind: input, shape index: {}]
  %s1 = inlined_call_operand.hbm [shape: f32[16,176], index: 1, kind: output, shape index: {}]
  %s2 = sld [smem:[#allocation0]]
  $region41: #{tpu_custom_call.1} parent=0
    _
  %s4 = ssub.s32 1, %s2
  %s5 = scalar_select 0, %s4, %s2
  $region1: #{tpu_custom_call.1} parent=0
    #allocation2 [shape = 'u8[8192]{0}', space=vmem, size = 0x2000, scoped, tag = 'input window, operand 0']
    #allocation3 [shape = 's32[2]{0}', space=sflag, size = 0x8, scoped, tag = 'scoped memory for tpu_custom_call.1']
    #allocation4 [shape = 's32[2]{0}', space=sflag, size = 0x8, scoped, tag = 'scoped memory for tpu_custom_call.1']
    #allocation5 [shape = 'u8[16384]{0}', space=vmem, size = 0x4000, scoped, tag = 'output window, operand 0']
    %6 = vsyncpa [#allocation3], 0
    %s7 = scalar_lea.sflag [#allocation3], 1
    %8 = vsyncpa %s7, 0
    %9 = vsyncpa [#allocation4], 0
    %s10 = scalar_lea.sflag [#allocation4], 1
    %11 = vsyncpa %s10, 0
    loop: start=0, step=1, limit=4
    $region2: #{tpu_custom_call.1} parent=1 // loop_pre_header
      _
    $region3: #{tpu_custom_call.1} parent=1 // loop_header
      %s13 = sphi 0, %s17
      %p14 = scmp.ge.s32.totalorder %s13, 4
      %s23 = sphi 0, %s25
      %s26 = sphi 0, %s23
      %s27 = sphi 0, %s26
      %s43 = sphi 0, %s27
      %s49 = sphi 0, %s51
      %s52 = sphi 0, %s49
      %s53 = sphi 0, %s52
      %s69 = sphi 0, %s53
    $region4: #{tpu_custom_call.1} parent=1 // loop_header_branch
      %16 = sbr.rel (%p14) target = $region8
    $region5: #{tpu_custom_call.1} parent=1 // loop_body
      %s18 = ssub.s32 %s13, 1
      %s19 = ssub.s32 %s13, 2
      %s20 = sadd.s32 %s13, 1
      %s21 = ssub.s32 %s13, %s20
      %p22 = scmp.eq.s32.totalorder %s21, 0
      %s24 = sadd.s32 %s23, 1
      %s25 = scalar_select %p22, %s23, %s24
      %p28 = pneg %p22
      %p29 = scmp.eq.s32.totalorder %s13, 1
      %p30 = por %p28, %p29
      %p31 = scmp.ne.s32.totalorder %s23, %s26
      %p32 = scmp.eq.s32.totalorder %s13, 0
      %p33 = por %p31, %p32
      %p34 = scmp.ne.s32.totalorder %s23, %s26
      %p35 = scmp.eq.s32.totalorder %s18, 1
      %p36 = por %p34, %p35
      %p37 = scmp.ne.s32.totalorder %s26, %s27
      %p38 = scmp.eq.s32.totalorder %s18, 0
      %p39 = por %p37, %p38
      %p40 = scmp.ne.s32.totalorder %s26, %s27
      %p41 = scmp.eq.s32.totalorder %s19, 1
      %p42 = por %p40, %p41
      %p44 = scmp.ne.s32.totalorder %s27, %s43
      %p45 = scmp.eq.s32.totalorder %s19, 0
      %p46 = por %p44, %p45
      %s47 = ssub.s32 %s13, %s20
      %p48 = scmp.eq.s32.totalorder %s47, 0
      %s50 = sadd.s32 %s49, 1
      %s51 = scalar_select %p48, %s49, %s50
      %p54 = pneg %p48
      %p55 = scmp.eq.s32.totalorder %s13, 1
      %p56 = por %p54, %p55
      %p57 = scmp.ne.s32.totalorder %s49, %s52
      %p58 = scmp.eq.s32.totalorder %s13, 0
      %p59 = por %p57, %p58
      %p60 = scmp.ne.s32.totalorder %s49, %s52
      %p61 = scmp.eq.s32.totalorder %s18, 1
      %p62 = por %p60, %p61
      %p63 = scmp.ne.s32.totalorder %s52, %s53
      %p64 = scmp.eq.s32.totalorder %s18, 0
      %p65 = por %p63, %p64
      %p66 = scmp.ne.s32.totalorder %s52, %s53
      %p67 = scmp.eq.s32.totalorder %s19, 1
      %p68 = por %p66, %p67
      %p70 = scmp.ne.s32.totalorder %s53, %s69
      %p71 = scmp.eq.s32.totalorder %s19, 0
      %p72 = por %p70, %p71
      %p73 = scmp.le.s32.totalorder 1, %s13
      %p74 = scmp.lt.s32.totalorder %s13, 3
      %p75 = pnand %p73, %p74
      %p76 = pneg %p75
      // Predicated region
      $region9: #{tpu_custom_call.1} parent=5 // pred_check
        _
      $region10: #{tpu_custom_call.1} parent=5 // pred_check_branch
        %78 = sbr.rel (%p75) target = $region12
      $region11: #{tpu_custom_call.1} parent=5 // pred_region
        %s79 = ssub.s32 %s13, 1
      $region12: #{tpu_custom_call.1} parent=5 // pred_fallthru
        _
      %p80 = scmp.lt.s32.totalorder %s13, 2
      // Predicated region
      $region13: #{tpu_custom_call.1} parent=5 // pred_check
        %p81 = pneg %p80
      $region14: #{tpu_custom_call.1} parent=5 // pred_check_branch
        %83 = sbr.rel (%p81) target = $region16
      $region15: #{tpu_custom_call.1} parent=5 // pred_region
        // Predicated region
        $region17: #{tpu_custom_call.1} parent=15 // pred_check
          %p84 = pneg %p33
        $region18: #{tpu_custom_call.1} parent=15 // pred_check_branch
          %86 = sbr.rel (%p84) target = $region20
        $region19: #{tpu_custom_call.1} parent=15 // pred_region
          %s87 = sand.u32 %s23, 1
          %s88 = scalar_lea.sflag [#allocation3], %s87
          %s89 = sand.u32 %s23, 1
          %s90 = smul.addr %s89, 8
          %s91 = scalar_lea.vmem [#allocation2], %s90
          %s93 = ssub.s32 128, 128
          %94 = vsyncadd %s88, %s93
          %s95 = smul.addr %s13, 128
          %s96 = scalar_lea.hbm %s0, %s95
          %s98 = sshll.u32 %s91, 4
          %s99 = int_to_ptr.vmem [resolvable:$true] %s98
          %101 = dma.hbm_to_vmem [thread:$0]  %s96, 128, %s99, %s88
        $region20: #{tpu_custom_call.1} parent=15 // pred_fallthru
          _
      $region16: #{tpu_custom_call.1} parent=5 // pred_fallthru
        _
      %p102 = scmp.le.s32.totalorder 1, %s13
      %p103 = scmp.lt.s32.totalorder %s13, 3
      %p104 = pnand %p102, %p103
      %p105 = pneg %p104
      // Predicated region
      $region21: #{tpu_custom_call.1} parent=5 // pred_check
        _
      $region22: #{tpu_custom_call.1} parent=5 // pred_check_branch
        %107 = sbr.rel (%p104) target = $region24
      $region23: #{tpu_custom_call.1} parent=5 // pred_region
        %s108 = ssub.s32 %s13, 1
        %s109 = sand.u32 %s26, 1
        %s110 = scalar_lea.sflag [#allocation3], %s109
        %s111 = sand.u32 %s26, 1
        %s112 = smul.addr %s111, 8
        %s113 = scalar_lea.vmem [#allocation2], %s112
        // Predicated region
        $region25: #{tpu_custom_call.1} parent=23 // pred_check
          %p114 = pneg %p39
        $region26: #{tpu_custom_call.1} parent=23 // pred_check_branch
          %116 = sbr.rel (%p114) target = $region28
        $region27: #{tpu_custom_call.1} parent=23 // pred_region
          %117 = dma.done %s110, 128
        $region28: #{tpu_custom_call.1} parent=23 // pred_fallthru
          _
        %s118 = sand.u32 %s26, 1
        %s119 = scalar_lea.sflag [#allocation3], %s118
        %s120 = sand.u32 %s26, 1
        %s121 = smul.addr %s120, 8
        %s122 = scalar_lea.vmem [#allocation2], %s121
        %p123 = pneg %p39
        %p124 = pneg %p36
        %p125 = pneg %p65
        %p126 = pneg %p62
        %s127 = sand.u32 %s52, 1
        %s128 = scalar_lea.sflag [#allocation4], %s127
        %s129 = sand.u32 %s52, 1
        %s130 = smul.addr %s129, 16
        %s131 = scalar_lea.vmem [#allocation5], %s130
        %v132 = vld [vmem:[%s113] sm:$0xff]
        %v133 = vlaneseq
        %v134 = vand.u32 %v133, 127
        %vm135 = vcmp.lt.s32.totalorder %v134, 10
        %v136 = vsel %vm135, 0.01, 1.0
        %v137 = vmul.f32 %v136, 3.1415927
        %v138 = vrcp.pop %v136
        %v139 = vmul.f32 1.0, %v138
        %vm140 = vcmask 130048
        %141 = vst.msk [vmem:[%s131] sm:$0xff] %vm140, %v132
        %v142 = vmul.f32 %v132, %v137
        %v143 = vand.u32 2147483647, %v142
        %vm144 = vcmp.le.f32.partialorder %v143, 0.7853982
        %vm145 = vcmp.lt.s32.totalorder %v142, 0
        %v146 = vand.u32 %v142, 2139095040
        %v147 = vshrl.u32 %v146, 23
        %v148 = vsub.s32 %v147, 127
        %v149 = vand.u32 2147483647, %v142
        %v150 = vand.u32 %v149, 8388607
        %v151 = vor.u32 %v150, 8388608
        %v152 = vsub.s32 0, %v151
        %v153 = vadd.s32 %v148, 1
        %vm154 = vcmp.gt.s32.totalorder %v153, 0
        %v155 = vsel %vm154, %v153, 0
        %v156 = vshrl.u32 %v155, 5
        %v157 = vand.u32 %v155, 31
        %v158 = vsub.s32 32, %v157
        %v159 = vshrl.u32 683565275, %v158
        %v160 = vshll.u32 683565275, %v157
        %v161 = vshrl.u32 2475754826, %v158
        %v162 = vor.u32 %v160, %v161
        %v163 = vshll.u32 2475754826, %v157
        %v164 = vshrl.u32 2131351028, %v158
        %v165 = vor.u32 %v163, %v164
        %v166 = vshll.u32 2131351028, %v157
        %v167 = vshrl.u32 2102212464, %v158
        %v168 = vor.u32 %v166, %v167
        %v169 = vshll.u32 2102212464, %v157
        %v170 = vshrl.u32 920167782, %v158
        %v171 = vor.u32 %v169, %v170
        %v172 = vshll.u32 920167782, %v157
        %v173 = vshrl.u32 1326507024, %v158
        %v174 = vor.u32 %v172, %v173
        %vm175 = vcmp.lt.s32.totalorder %v156, 1
        %vm176 = vcmp.lt.s32.totalorder %v156, 2
        %vm177 = vcmp.lt.s32.totalorder %v156, 3
        %vm178 = vcmp.lt.s32.totalorder %v156, 4
        %v179 = vsel %vm175, %v159, %v162
        %v180 = vsel %vm178, %v168, 2102212464
        %v181 = vsel %vm177, %v165, %v180
        %v182 = vsel %vm176, %v179, %v181
        %v183 = vsel %vm175, %v162, %v165
        %v184 = vsel %vm178, %v171, 920167782
        %v185 = vsel %vm177, %v168, %v184
        %v186 = vsel %vm176, %v183, %v185
        %v187 = vsel %vm175, %v165, %v168
        %v188 = vsel %vm178, %v174, 1326507024
        %v189 = vsel %vm177, %v171, %v188
        %v190 = vsel %vm176, %v187, %v189
        %v191 = vshll.u32 %v151, 8
        %v192 = vmul.u32.u64.compose %v191, %v190
        %v193 = vextract.low.u32 %v192
        %v194 = vextract.high.u32 %v192
        %v195 = vmul.u32.u64.compose %v191, %v186
        %v196 = vextract.low.u32 %v195
        %v197 = vextract.high.u32 %v195
        %v198 = vmul.u32 %v191, %v182
        %v199 = vadd.s32 %v194, %v196
        %vm200 = vc.u32 %v194, %v196
        %v201 = vadd.s32 %v197, 1
        %v202 = vsel %vm200, %v201, %v197
        %v203 = vadd.s32 %v198, %v202
        %v204 = vadd.s32 %v203, 536870912
        %v205 = vshrl.u32 %v204, 30
        %v206 = vshll.u32 %v205, 30
        %v207 = vsub.s32 %v203, %v206
        %vm208 = vcmp.lt.s32.totalorder %v207, 0
        %v209 = vsub.s32 0, %v207
        %v210 = vsel %vm208, %v209, %v207
        %v211 = vclz %v210
        %v212 = vsub.s32 %v211, 2
        %vm213 = vcmp.gt.s32.totalorder 0, %v212
        %v214 = vsel %vm213, 0, %v212
        %v215 = vsub.s32 32, %v214
        %v216 = vshll.u32 %v207, %v214
        %v217 = vshrl.u32 %v199, %v215
        %v218 = vor.u32 %v216, %v217
        %v219 = vsub.s32 4294967266, %v214
        %v220 = vadd.s32 %v219, 127
        %v221 = vshll.u32 %v220, 23
        %v222 = vor.u32 4788187, %v221
        %v223 = vand.u32 2147483647, %v222
        %v225 = vcvt.s32.f32 %v218
        %v226 = vmul.f32 %v225, %v223
        %v227 = vxor.u32 %v226, 2147483648
        %v228 = vsel %vm145, %v227, %v226
        %v229 = vsub.s32 4, %v205
        %v230 = vsel %vm145, %v229, %v205
        %v231 = vsel %vm144, %v142, %v228
        %v232 = vsel %vm144, 0, %v230
        %v233 = vcosq.f32.pop %v231
        %v234 = vsinq.f32.pop %v231
        %vm235 = vweird.f32 %v142
        %v236 = vadd.s32 %v232, 3
        %v237 = vand.u32 %v236, 3
        %vm238 = vcmp.lt.s32.totalorder %v237, 2
        %vm239 = vcmp.eq.s32.totalorder %v237, 0
        %v240 = vxor.u32 %v234, 2147483648
        %v241 = vsel %vm239, %v233, %v240
        %vm242 = vcmp.eq.s32.totalorder %v237, 2
        %v243 = vxor.u32 %v233, 2147483648
        %v244 = vsel %vm242, %v243, %v234
        %v245 = vsel %vm238, %v241, %v244
        %v246 = vsel %vm235, nan, %v245
        %v247 = vand.u32 2147483647, %v142
        %vm248 = vcmp.le.f32.partialorder %v247, 0.7853982
        %vm249 = vcmp.lt.s32.totalorder %v142, 0
        %v250 = vand.u32 %v142, 2139095040
        %v251 = vshrl.u32 %v250, 23
        %v252 = vsub.s32 %v251, 127
        %v253 = vand.u32 2147483647, %v142
        %v254 = vand.u32 %v253, 8388607
        %v255 = vor.u32 %v254, 8388608
        %v256 = vsub.s32 0, %v255
        %v257 = vadd.s32 %v252, 1
        %vm258 = vcmp.gt.s32.totalorder %v257, 0
        %v259 = vsel %vm258, %v257, 0
        %v260 = vshrl.u32 %v259, 5
        %v261 = vand.u32 %v259, 31
        %v262 = vsub.s32 32, %v261
        %v263 = vshrl.u32 683565275, %v262
        %v264 = vshll.u32 683565275, %v261
        %v265 = vshrl.u32 2475754826, %v262
        %v266 = vor.u32 %v264, %v265
        %v267 = vshll.u32 2475754826, %v261
        %v268 = vshrl.u32 2131351028, %v262
        %v269 = vor.u32 %v267, %v268
        %v270 = vshll.u32 2131351028, %v261
        %v271 = vshrl.u32 2102212464, %v262
        %v272 = vor.u32 %v270, %v271
        %v273 = vshll.u32 2102212464, %v261
        %v274 = vshrl.u32 920167782, %v262
        %v275 = vor.u32 %v273, %v274
        %v276 = vshll.u32 920167782, %v261
        %v277 = vshrl.u32 1326507024, %v262
        %v278 = vor.u32 %v276, %v277
        %vm279 = vcmp.lt.s32.totalorder %v260, 1
        %vm280 = vcmp.lt.s32.totalorder %v260, 2
        %vm281 = vcmp.lt.s32.totalorder %v260, 3
        %vm282 = vcmp.lt.s32.totalorder %v260, 4
        %v283 = vsel %vm279, %v263, %v266
        %v284 = vsel %vm282, %v272, 2102212464
        %v285 = vsel %vm281, %v269, %v284
        %v286 = vsel %vm280, %v283, %v285
        %v287 = vsel %vm279, %v266, %v269
        %v288 = vsel %vm282, %v275, 920167782
        %v289 = vsel %vm281, %v272, %v288
        %v290 = vsel %vm280, %v287, %v289
        %v291 = vsel %vm279, %v269, %v272
        %v292 = vsel %vm282, %v278, 1326507024
        %v293 = vsel %vm281, %v275, %v292
        %v294 = vsel %vm280, %v291, %v293
        %v295 = vshll.u32 %v255, 8
        %v296 = vmul.u32.u64.compose %v295, %v294
        %v297 = vextract.low.u32 %v296
        %v298 = vextract.high.u32 %v296
        %v299 = vmul.u32.u64.compose %v295, %v290
        %v300 = vextract.low.u32 %v299
        %v301 = vextract.high.u32 %v299
        %v302 = vmul.u32 %v295, %v286
        %v303 = vadd.s32 %v298, %v300
        %vm304 = vc.u32 %v298, %v300
        %v305 = vadd.s32 %v301, 1
        %v306 = vsel %vm304, %v305, %v301
        %v307 = vadd.s32 %v302, %v306
        %v308 = vadd.s32 %v307, 536870912
        %v309 = vshrl.u32 %v308, 30
        %v310 = vshll.u32 %v309, 30
        %v311 = vsub.s32 %v307, %v310
        %vm312 = vcmp.lt.s32.totalorder %v311, 0
        %v313 = vsub.s32 0, %v311
        %v314 = vsel %vm312, %v313, %v311
        %v315 = vclz %v314
        %v316 = vsub.s32 %v315, 2
        %vm317 = vcmp.gt.s32.totalorder 0, %v316
        %v318 = vsel %vm317, 0, %v316
        %v319 = vsub.s32 32, %v318
        %v320 = vshll.u32 %v311, %v318
        %v321 = vshrl.u32 %v303, %v319
        %v322 = vor.u32 %v320, %v321
        %v323 = vsub.s32 4294967266, %v318
        %v324 = vadd.s32 %v323, 127
        %v325 = vshll.u32 %v324, 23
        %v326 = vor.u32 4788187, %v325
        %v327 = vand.u32 2147483647, %v326
        %v329 = vcvt.s32.f32 %v322
        %v330 = vmul.f32 %v329, %v327
        %v331 = vxor.u32 %v330, 2147483648
        %v332 = vsel %vm249, %v331, %v330
        %v333 = vsub.s32 4, %v309
        %v334 = vsel %vm249, %v333, %v309
        %v335 = vsel %vm248, %v142, %v332
        %v336 = vsel %vm248, 0, %v334
        %v337 = vcosq.f32.pop %v335
        %v338 = vsinq.f32.pop %v335
        %vm339 = vweird.f32 %v142
        %v340 = vand.u32 %v336, 3
        %vm341 = vcmp.lt.s32.totalorder %v340, 2
        %vm342 = vcmp.eq.s32.totalorder %v340, 0
        %v343 = vxor.u32 %v338, 2147483648
        %v344 = vsel %vm342, %v337, %v343
        %vm345 = vcmp.eq.s32.totalorder %v340, 2
        %v346 = vxor.u32 %v337, 2147483648
        %v347 = vsel %vm345, %v346, %v338
        %v348 = vsel %vm341, %v344, %v347
        %v349 = vsel %vm339, nan, %v348
        %v350 = vmul.f32 %v246, %v139
        %352 = vrot.lane.b32.xlu0 %v350, 16
        %v353 = vpop.permute.xlu0 %352
        %vm355 = vcmask 261248
        %356 = vst.msk [vmem:[%s131] sm:$0xff] %vm355, %v353
        %v357 = vmul.f32 %v349, %v139
        %359 = vrot.lane.b32.xlu0 %v357, 32
        %v360 = vpop.permute.xlu0 %359
        %vm362 = vcmask 392448
        %363 = vst.msk [vmem:[%s131] sm:$0xff] %vm362, %v360
        %v364 = vmul.f32 %v246, 2.0
        %v365 = vmul.f32 %v364, %v349
        %v366 = vmul.f32 %v349, 2.0
        %v367 = vmul.f32 %v366, %v349
        %v368 = vsub.f32 %v367, 1.0
        %v369 = vmul.f32 %v365, %v139
        %371 = vrot.lane.b32.xlu0 %v369, 48
        %v372 = vpop.permute.xlu0 %371
        %vm374 = vcmask 523648
        %375 = vst.msk [vmem:[%s131] sm:$0xff] %vm374, %v372
        %v376 = vmul.f32 %v368, %v139
        %378 = vrot.lane.b32.xlu0 %v376, 64
        %v379 = vpop.permute.xlu0 %378
        %vm381 = vcmask 654848
        %382 = vst.msk [vmem:[%s131] sm:$0xff] %vm381, %v379
        %v383 = vmul.f32 %v365, 2.0
        %v384 = vmul.f32 %v383, %v368
        %v385 = vmul.f32 %v368, 2.0
        %v386 = vmul.f32 %v385, %v368
        %v387 = vsub.f32 %v386, 1.0
        %v388 = vmul.f32 %v384, %v139
        %390 = vrot.lane.b32.xlu0 %v388, 80
        %v391 = vpop.permute.xlu0 %390
        %vm393 = vcmask 786048
        %394 = vst.msk [vmem:[%s131] sm:$0xff] %vm393, %v391
        %v395 = vmul.f32 %v387, %v139
        %397 = vrot.lane.b32.xlu0 %v395, 96
        %v398 = vpop.permute.xlu0 %397
        %vm400 = vcmask 917248
        %401 = vst.msk [vmem:[%s131] sm:$0xff] %vm400, %v398
        %v402 = vmul.f32 %v142, 8.0
        %v403 = vand.u32 2147483647, %v402
        %vm404 = vcmp.le.f32.partialorder %v403, 0.7853982
        %vm405 = vcmp.lt.s32.totalorder %v402, 0
        %v406 = vand.u32 %v402, 2139095040
        %v407 = vshrl.u32 %v406, 23
        %v408 = vsub.s32 %v407, 127
        %v409 = vand.u32 2147483647, %v402
        %v410 = vand.u32 %v409, 8388607
        %v411 = vor.u32 %v410, 8388608
        %v412 = vsub.s32 0, %v411
        %v413 = vadd.s32 %v408, 1
        %vm414 = vcmp.gt.s32.totalorder %v413, 0
        %v415 = vsel %vm414, %v413, 0
        %v416 = vshrl.u32 %v415, 5
        %v417 = vand.u32 %v415, 31
        %v418 = vsub.s32 32, %v417
        %v419 = vshrl.u32 683565275, %v418
        %v420 = vshll.u32 683565275, %v417
        %v421 = vshrl.u32 2475754826, %v418
        %v422 = vor.u32 %v420, %v421
        %v423 = vshll.u32 2475754826, %v417
        %v424 = vshrl.u32 2131351028, %v418
        %v425 = vor.u32 %v423, %v424
        %v426 = vshll.u32 2131351028, %v417
        %v427 = vshrl.u32 2102212464, %v418
        %v428 = vor.u32 %v426, %v427
        %v429 = vshll.u32 2102212464, %v417
        %v430 = vshrl.u32 920167782, %v418
        %v431 = vor.u32 %v429, %v430
        %v432 = vshll.u32 920167782, %v417
        %v433 = vshrl.u32 1326507024, %v418
        %v434 = vor.u32 %v432, %v433
        %vm435 = vcmp.lt.s32.totalorder %v416, 1
        %vm436 = vcmp.lt.s32.totalorder %v416, 2
        %vm437 = vcmp.lt.s32.totalorder %v416, 3
        %vm438 = vcmp.lt.s32.totalorder %v416, 4
        %v439 = vsel %vm435, %v419, %v422
        %v440 = vsel %vm438, %v428, 2102212464
        %v441 = vsel %vm437, %v425, %v440
        %v442 = vsel %vm436, %v439, %v441
        %v443 = vsel %vm435, %v422, %v425
        %v444 = vsel %vm438, %v431, 920167782
        %v445 = vsel %vm437, %v428, %v444
        %v446 = vsel %vm436, %v443, %v445
        %v447 = vsel %vm435, %v425, %v428
        %v448 = vsel %vm438, %v434, 1326507024
        %v449 = vsel %vm437, %v431, %v448
        %v450 = vsel %vm436, %v447, %v449
        %v451 = vshll.u32 %v411, 8
        %v452 = vmul.u32.u64.compose %v451, %v450
        %v453 = vextract.low.u32 %v452
        %v454 = vextract.high.u32 %v452
        %v455 = vmul.u32.u64.compose %v451, %v446
        %v456 = vextract.low.u32 %v455
        %v457 = vextract.high.u32 %v455
        %v458 = vmul.u32 %v451, %v442
        %v459 = vadd.s32 %v454, %v456
        %vm460 = vc.u32 %v454, %v456
        %v461 = vadd.s32 %v457, 1
        %v462 = vsel %vm460, %v461, %v457
        %v463 = vadd.s32 %v458, %v462
        %v464 = vadd.s32 %v463, 536870912
        %v465 = vshrl.u32 %v464, 30
        %v466 = vshll.u32 %v465, 30
        %v467 = vsub.s32 %v463, %v466
        %vm468 = vcmp.lt.s32.totalorder %v467, 0
        %v469 = vsub.s32 0, %v467
        %v470 = vsel %vm468, %v469, %v467
        %v471 = vclz %v470
        %v472 = vsub.s32 %v471, 2
        %vm473 = vcmp.gt.s32.totalorder 0, %v472
        %v474 = vsel %vm473, 0, %v472
        %v475 = vsub.s32 32, %v474
        %v476 = vshll.u32 %v467, %v474
        %v477 = vshrl.u32 %v459, %v475
        %v478 = vor.u32 %v476, %v477
        %v479 = vsub.s32 4294967266, %v474
        %v480 = vadd.s32 %v479, 127
        %v481 = vshll.u32 %v480, 23
        %v482 = vor.u32 4788187, %v481
        %v483 = vand.u32 2147483647, %v482
        %v485 = vcvt.s32.f32 %v478
        %v486 = vmul.f32 %v485, %v483
        %v487 = vxor.u32 %v486, 2147483648
        %v488 = vsel %vm405, %v487, %v486
        %v489 = vsub.s32 4, %v465
        %v490 = vsel %vm405, %v489, %v465
        %v491 = vsel %vm404, %v402, %v488
        %v492 = vsel %vm404, 0, %v490
        %v493 = vcosq.f32.pop %v491
        %v494 = vsinq.f32.pop %v491
        %vm495 = vweird.f32 %v402
        %v496 = vadd.s32 %v492, 3
        %v497 = vand.u32 %v496, 3
        %vm498 = vcmp.lt.s32.totalorder %v497, 2
        %vm499 = vcmp.eq.s32.totalorder %v497, 0
        %v500 = vxor.u32 %v494, 2147483648
        %v501 = vsel %vm499, %v493, %v500
        %vm502 = vcmp.eq.s32.totalorder %v497, 2
        %v503 = vxor.u32 %v493, 2147483648
        %v504 = vsel %vm502, %v503, %v494
        %v505 = vsel %vm498, %v501, %v504
        %v506 = vsel %vm495, nan, %v505
        %v507 = vand.u32 2147483647, %v402
        %vm508 = vcmp.le.f32.partialorder %v507, 0.7853982
        %vm509 = vcmp.lt.s32.totalorder %v402, 0
        %v510 = vand.u32 %v402, 2139095040
        %v511 = vshrl.u32 %v510, 23
        %v512 = vsub.s32 %v511, 127
        %v513 = vand.u32 2147483647, %v402
        %v514 = vand.u32 %v513, 8388607
        %v515 = vor.u32 %v514, 8388608
        %v516 = vsub.s32 0, %v515
        %v517 = vadd.s32 %v512, 1
        %vm518 = vcmp.gt.s32.totalorder %v517, 0
        %v519 = vsel %vm518, %v517, 0
        %v520 = vshrl.u32 %v519, 5
        %v521 = vand.u32 %v519, 31
        %v522 = vsub.s32 32, %v521
        %v523 = vshrl.u32 683565275, %v522
        %v524 = vshll.u32 683565275, %v521
        %v525 = vshrl.u32 2475754826, %v522
        %v526 = vor.u32 %v524, %v525
        %v527 = vshll.u32 2475754826, %v521
        %v528 = vshrl.u32 2131351028, %v522
        %v529 = vor.u32 %v527, %v528
        %v530 = vshll.u32 2131351028, %v521
        %v531 = vshrl.u32 2102212464, %v522
        %v532 = vor.u32 %v530, %v531
        %v533 = vshll.u32 2102212464, %v521
        %v534 = vshrl.u32 920167782, %v522
        %v535 = vor.u32 %v533, %v534
        %v536 = vshll.u32 920167782, %v521
        %v537 = vshrl.u32 1326507024, %v522
        %v538 = vor.u32 %v536, %v537
        %vm539 = vcmp.lt.s32.totalorder %v520, 1
        %vm540 = vcmp.lt.s32.totalorder %v520, 2
        %vm541 = vcmp.lt.s32.totalorder %v520, 3
        %vm542 = vcmp.lt.s32.totalorder %v520, 4
        %v543 = vsel %vm539, %v523, %v526
        %v544 = vsel %vm542, %v532, 2102212464
        %v545 = vsel %vm541, %v529, %v544
        %v546 = vsel %vm540, %v543, %v545
        %v547 = vsel %vm539, %v526, %v529
        %v548 = vsel %vm542, %v535, 920167782
        %v549 = vsel %vm541, %v532, %v548
        %v550 = vsel %vm540, %v547, %v549
        %v551 = vsel %vm539, %v529, %v532
        %v552 = vsel %vm542, %v538, 1326507024
        %v553 = vsel %vm541, %v535, %v552
        %v554 = vsel %vm540, %v551, %v553
        %v555 = vshll.u32 %v515, 8
        %v556 = vmul.u32.u64.compose %v555, %v554
        %v557 = vextract.low.u32 %v556
        %v558 = vextract.high.u32 %v556
        %v559 = vmul.u32.u64.compose %v555, %v550
        %v560 = vextract.low.u32 %v559
        %v561 = vextract.high.u32 %v559
        %v562 = vmul.u32 %v555, %v546
        %v563 = vadd.s32 %v558, %v560
        %vm564 = vc.u32 %v558, %v560
        %v565 = vadd.s32 %v561, 1
        %v566 = vsel %vm564, %v565, %v561
        %v567 = vadd.s32 %v562, %v566
        %v568 = vadd.s32 %v567, 536870912
        %v569 = vshrl.u32 %v568, 30
        %v570 = vshll.u32 %v569, 30
        %v571 = vsub.s32 %v567, %v570
        %vm572 = vcmp.lt.s32.totalorder %v571, 0
        %v573 = vsub.s32 0, %v571
        %v574 = vsel %vm572, %v573, %v571
        %v575 = vclz %v574
        %v576 = vsub.s32 %v575, 2
        %vm577 = vcmp.gt.s32.totalorder 0, %v576
        %v578 = vsel %vm577, 0, %v576
        %v579 = vsub.s32 32, %v578
        %v580 = vshll.u32 %v571, %v578
        %v581 = vshrl.u32 %v563, %v579
        %v582 = vor.u32 %v580, %v581
        %v583 = vsub.s32 4294967266, %v578
        %v584 = vadd.s32 %v583, 127
        %v585 = vshll.u32 %v584, 23
        %v586 = vor.u32 4788187, %v585
        %v587 = vand.u32 2147483647, %v586
        %v589 = vcvt.s32.f32 %v582
        %v590 = vmul.f32 %v589, %v587
        %v591 = vxor.u32 %v590, 2147483648
        %v592 = vsel %vm509, %v591, %v590
        %v593 = vsub.s32 4, %v569
        %v594 = vsel %vm509, %v593, %v569
        %v595 = vsel %vm508, %v402, %v592
        %v596 = vsel %vm508, 0, %v594
        %v597 = vcosq.f32.pop %v595
        %v598 = vsinq.f32.pop %v595
        %vm599 = vweird.f32 %v402
        %v600 = vand.u32 %v596, 3
        %vm601 = vcmp.lt.s32.totalorder %v600, 2
        %vm602 = vcmp.eq.s32.totalorder %v600, 0
        %v603 = vxor.u32 %v598, 2147483648
        %v604 = vsel %vm602, %v597, %v603
        %vm605 = vcmp.eq.s32.totalorder %v600, 2
        %v606 = vxor.u32 %v597, 2147483648
        %v607 = vsel %vm605, %v606, %v598
        %v608 = vsel %vm601, %v604, %v607
        %v609 = vsel %vm599, nan, %v608
        %v610 = vmul.f32 %v506, %v139
        %612 = vrot.lane.b32.xlu0 %v610, 112
        %v613 = vpop.permute.xlu0 %612
        %vm615 = vcmask 1048448
        %616 = vst.msk [vmem:[%s131] sm:$0xff] %vm615, %v613
        %v617 = vmul.f32 %v609, %v139
        %618 = vst.msk [vmem:[%s131 + $0x8] sm:$0xff] %vm140, %v617
        %v619 = vmul.f32 %v506, 2.0
        %v620 = vmul.f32 %v619, %v609
        %v621 = vmul.f32 %v609, 2.0
        %v622 = vmul.f32 %v621, %v609
        %v623 = vsub.f32 %v622, 1.0
        %v624 = vmul.f32 %v620, %v139
        %626 = vrot.lane.b32.xlu0 %v624, 16
        %v627 = vpop.permute.xlu0 %626
        %629 = vst.msk [vmem:[%s131 + $0x8] sm:$0xff] %vm355, %v627
        %v630 = vmul.f32 %v623, %v139
        %632 = vrot.lane.b32.xlu0 %v630, 32
        %v633 = vpop.permute.xlu0 %632
        %635 = vst.msk [vmem:[%s131 + $0x8] sm:$0xff] %vm362, %v633
        %s636 = sand.u32 %s52, 1
        %s637 = scalar_lea.sflag [#allocation4], %s636
        %s638 = sand.u32 %s52, 1
        %s639 = smul.addr %s638, 16
        %s640 = scalar_lea.vmem [#allocation5], %s639
        // Predicated region
        $region29: #{tpu_custom_call.1} parent=23 // pred_check
          %p641 = pneg %p62
        $region30: #{tpu_custom_call.1} parent=23 // pred_check_branch
          %643 = sbr.rel (%p641) target = $region32
        $region31: #{tpu_custom_call.1} parent=23 // pred_region
          %s645 = ssub.s32 256, 256
          %646 = vsyncadd %s637, %s645
          %s647 = smul.addr %s18, 2
          %s648 = smul.addr %s647, 128
          %s649 = scalar_lea.hbm %s1, %s648
          %s651 = sshll.u32 %s640, 4
          %s652 = int_to_ptr.vmem [resolvable:$true] %s651
          %654 = dma.vmem_to_hbm [thread:$0]  %s652, 256, %s649, %s637
        $region32: #{tpu_custom_call.1} parent=23 // pred_fallthru
          _
      $region24: #{tpu_custom_call.1} parent=5 // pred_fallthru
        _
      %p655 = scmp.le.s32.totalorder 2, %s13
      // Predicated region
      $region33: #{tpu_custom_call.1} parent=5 // pred_check
        %p656 = pneg %p655
      $region34: #{tpu_custom_call.1} parent=5 // pred_check_branch
        %658 = sbr.rel (%p656) target = $region36
      $region35: #{tpu_custom_call.1} parent=5 // pred_region
        %s659 = ssub.s32 %s13, 2
        // Predicated region
        $region37: #{tpu_custom_call.1} parent=35 // pred_check
          %p660 = pneg %p68
        $region38: #{tpu_custom_call.1} parent=35 // pred_check_branch
          %662 = sbr.rel (%p660) target = $region40
        $region39: #{tpu_custom_call.1} parent=35 // pred_region
          %s663 = sand.u32 %s53, 1
          %s664 = scalar_lea.sflag [#allocation4], %s663
          %s665 = sand.u32 %s53, 1
          %s666 = smul.addr %s665, 16
          %s667 = scalar_lea.vmem [#allocation5], %s666
          %668 = dma.done %s664, 256
        $region40: #{tpu_custom_call.1} parent=35 // pred_fallthru
          _
      $region36: #{tpu_custom_call.1} parent=5 // pred_fallthru
        _
    $region6: #{tpu_custom_call.1} parent=1 // loop_footer
      %s17 = sadd.s32 1, %s13
    $region7: #{tpu_custom_call.1} parent=1 // loop_footer_branch
      %12 = sbr.rel target = $region3
    $region8: #{tpu_custom_call.1} parent=1 // loop_exit
      _
    %669 = vsyncpa [#allocation3], 1
    %s670 = scalar_lea.sflag [#allocation3], 1
    %671 = vsyncpa %s670, 1
    %672 = vsyncpa [#allocation4], 1
    %s673 = scalar_lea.sflag [#allocation4], 1
    %674 = vsyncpa %s673, 1

// kernel: tpu_custom_call.1
$region0: #{tpu_custom_call.1}
  #allocation0 [shape = 'u32[]', space=smem, size = 0x4, offset = 0x4, fixed_abs, tag = 'smem constant byte address 0x4 - core index']
  #allocation1 [shape = 'u32[144,128]{1,0:T(1,128)}', space=vmem, size = 0x12000, scoped, tag = 'internal scratch']
  %s0 = inlined_call_operand.hbm [shape: f32[16,16], index: 0, kind: input, shape index: {}]
  %s1 = inlined_call_operand.vmem [shape: f32[176,16], index: 1, kind: output, shape index: {}]
  %s2 = sld [smem:[#allocation0]]
  $region18: #{tpu_custom_call.1} parent=0
    _
  %s4 = ssub.s32 1, %s2
  %s5 = scalar_select 0, %s4, %s2
  $region1: #{tpu_custom_call.1} parent=0
    #allocation2 [shape = 'u8[8192]{0}', space=vmem, size = 0x2000, scoped, tag = 'input window, operand 0, single buffered']
    #allocation3 [shape = 's32[1]{0}', space=sflag, size = 0x4, scoped, tag = 'scoped memory for tpu_custom_call.1']
    %6 = vsyncpa [#allocation3], 0
    // Predicated region
    $region2: #{tpu_custom_call.1} parent=1 // pred_check
      _
    $region3: #{tpu_custom_call.1} parent=1 // pred_check_branch
      %8 = sbr.rel (0) target = $region5
    $region4: #{tpu_custom_call.1} parent=1 // pred_region
      %s10 = ssub.s32 256, 256
      %11 = vsyncadd [#allocation3], %s10
      %s12 = sshll.u32 [#allocation2], 4
      %s13 = int_to_ptr.vmem [resolvable:$true] %s12
      %18 = dma.hbm_to_vmem [thread:$0]  %s0, 256, %s13, [#allocation3], 128, 128, 8
    $region5: #{tpu_custom_call.1} parent=1 // pred_fallthru
      _
    // Predicated region
    $region6: #{tpu_custom_call.1} parent=1 // pred_check
      _
    $region7: #{tpu_custom_call.1} parent=1 // pred_check_branch
      %20 = sbr.rel (0) target = $region9
    $region8: #{tpu_custom_call.1} parent=1 // pred_region
      %21 = dma.done [#allocation3], 256
    $region9: #{tpu_custom_call.1} parent=1 // pred_fallthru
      _
    %v22 = vld [vmem:[#allocation2] sm:$0xff]
    %v23 = vld [vmem:[#allocation2 + $0x8] sm:$0xff]
    %v24 = vlaneseq
    %v25 = vshrl.u32 %v24, 7
    %v26 = vadd.s32 %v25, 8
    %vm27 = vcmp.lt.s32.totalorder %v25, 10
    %vm28 = vcmp.lt.s32.totalorder %v26, 10
    %v29 = vsel %vm27, 0.01, 1.0
    %v30 = vsel %vm28, 0.01, 1.0
    %v31 = vmul.f32 %v29, 3.1415927
    %v32 = vmul.f32 %v30, 3.1415927
    %v33 = vrcp.pop %v29
    %v34 = vmul.f32 1.0, %v33
    %v35 = vrcp.pop %v30
    %v36 = vmul.f32 1.0, %v35
    %vm37 = vcmask 130048
    %38 = vst.msk [vmem:[%s1] sm:$0xff] %vm37, %v22
    %39 = vst.msk [vmem:[%s1 + $0x8] sm:$0xff] %vm37, %v23
    %v40 = vmul.f32 %v22, %v31
    %v41 = vmul.f32 %v23, %v32
    %v42 = vand.u32 2147483647, %v40
    %vm43 = vcmp.le.f32.partialorder %v42, 0.7853982
    %vm44 = vcmp.lt.s32.totalorder %v40, 0
    %v45 = vand.u32 %v40, 2139095040
    %v46 = vshrl.u32 %v45, 23
    %v47 = vsub.s32 %v46, 127
    %v48 = vand.u32 2147483647, %v40
    %v49 = vand.u32 %v48, 8388607
    %v50 = vor.u32 %v49, 8388608
    %v51 = vsub.s32 0, %v50
    %v52 = vadd.s32 %v47, 1
    %vm53 = vcmp.gt.s32.totalorder %v52, 0
    %v54 = vsel %vm53, %v52, 0
    %v55 = vshrl.u32 %v54, 5
    %v56 = vand.u32 %v54, 31
    %v57 = vsub.s32 32, %v56
    %v58 = vshrl.u32 683565275, %v57
    %v59 = vshll.u32 683565275, %v56
    %v60 = vshrl.u32 2475754826, %v57
    %v61 = vor.u32 %v59, %v60
    %v62 = vshll.u32 2475754826, %v56
    %v63 = vshrl.u32 2131351028, %v57
    %v64 = vor.u32 %v62, %v63
    %v65 = vshll.u32 2131351028, %v56
    %v66 = vshrl.u32 2102212464, %v57
    %v67 = vor.u32 %v65, %v66
    %v68 = vshll.u32 2102212464, %v56
    %v69 = vshrl.u32 920167782, %v57
    %v70 = vor.u32 %v68, %v69
    %v71 = vshll.u32 920167782, %v56
    %v72 = vshrl.u32 1326507024, %v57
    %v73 = vor.u32 %v71, %v72
    %vm74 = vcmp.lt.s32.totalorder %v55, 1
    %vm75 = vcmp.lt.s32.totalorder %v55, 2
    %vm76 = vcmp.lt.s32.totalorder %v55, 3
    %vm77 = vcmp.lt.s32.totalorder %v55, 4
    %v78 = vsel %vm74, %v58, %v61
    %v79 = vsel %vm77, %v67, 2102212464
    %v80 = vsel %vm76, %v64, %v79
    %v81 = vsel %vm75, %v78, %v80
    %v82 = vsel %vm74, %v61, %v64
    %v83 = vsel %vm77, %v70, 920167782
    %v84 = vsel %vm76, %v67, %v83
    %v85 = vsel %vm75, %v82, %v84
    %v86 = vsel %vm74, %v64, %v67
    %v87 = vsel %vm77, %v73, 1326507024
    %v88 = vsel %vm76, %v70, %v87
    %v89 = vsel %vm75, %v86, %v88
    %v90 = vshll.u32 %v50, 8
    %v91 = vmul.u32.u64.compose %v90, %v89
    %v92 = vextract.low.u32 %v91
    %v93 = vextract.high.u32 %v91
    %v94 = vmul.u32.u64.compose %v90, %v85
    %v95 = vextract.low.u32 %v94
    %v96 = vextract.high.u32 %v94
    %v97 = vmul.u32 %v90, %v81
    %v98 = vadd.s32 %v93, %v95
    %vm99 = vc.u32 %v93, %v95
    %v100 = vadd.s32 %v96, 1
    %v101 = vsel %vm99, %v100, %v96
    %v102 = vadd.s32 %v97, %v101
    %v103 = vadd.s32 %v102, 536870912
    %v104 = vshrl.u32 %v103, 30
    %v105 = vshll.u32 %v104, 30
    %v106 = vsub.s32 %v102, %v105
    %vm107 = vcmp.lt.s32.totalorder %v106, 0
    %v108 = vsub.s32 0, %v106
    %v109 = vsel %vm107, %v108, %v106
    %v110 = vclz %v109
    %v111 = vsub.s32 %v110, 2
    %vm112 = vcmp.gt.s32.totalorder 0, %v111
    %v113 = vsel %vm112, 0, %v111
    %v114 = vsub.s32 32, %v113
    %v115 = vshll.u32 %v106, %v113
    %v116 = vshrl.u32 %v98, %v114
    %v117 = vor.u32 %v115, %v116
    %v118 = vsub.s32 4294967266, %v113
    %v119 = vadd.s32 %v118, 127
    %v120 = vshll.u32 %v119, 23
    %v121 = vor.u32 4788187, %v120
    %v122 = vand.u32 2147483647, %v121
    %v124 = vcvt.s32.f32 %v117
    %v125 = vmul.f32 %v124, %v122
    %v126 = vxor.u32 %v125, 2147483648
    %v127 = vsel %vm44, %v126, %v125
    %v128 = vsub.s32 4, %v104
    %v129 = vsel %vm44, %v128, %v104
    %v130 = vsel %vm43, %v40, %v127
    %v131 = vsel %vm43, 0, %v129
    %v132 = vcosq.f32.pop %v130
    %v133 = vsinq.f32.pop %v130
    %vm134 = vweird.f32 %v40
    %v135 = vadd.s32 %v131, 3
    %v136 = vand.u32 %v135, 3
    %vm137 = vcmp.lt.s32.totalorder %v136, 2
    %vm138 = vcmp.eq.s32.totalorder %v136, 0
    %v139 = vxor.u32 %v133, 2147483648
    %v140 = vsel %vm138, %v132, %v139
    %vm141 = vcmp.eq.s32.totalorder %v136, 2
    %v142 = vxor.u32 %v132, 2147483648
    %v143 = vsel %vm141, %v142, %v133
    %v144 = vsel %vm137, %v140, %v143
    %v145 = vsel %vm134, nan, %v144
    %v146 = vand.u32 2147483647, %v41
    %vm147 = vcmp.le.f32.partialorder %v146, 0.7853982
    %vm148 = vcmp.lt.s32.totalorder %v41, 0
    %v149 = vand.u32 %v41, 2139095040
    %v150 = vshrl.u32 %v149, 23
    %v151 = vsub.s32 %v150, 127
    %v152 = vand.u32 2147483647, %v41
    %v153 = vand.u32 %v152, 8388607
    %v154 = vor.u32 %v153, 8388608
    %v155 = vsub.s32 0, %v154
    %v156 = vadd.s32 %v151, 1
    %vm157 = vcmp.gt.s32.totalorder %v156, 0
    %v158 = vsel %vm157, %v156, 0
    %v159 = vshrl.u32 %v158, 5
    %v160 = vand.u32 %v158, 31
    %v161 = vsub.s32 32, %v160
    %v162 = vshrl.u32 683565275, %v161
    %v163 = vshll.u32 683565275, %v160
    %v164 = vshrl.u32 2475754826, %v161
    %v165 = vor.u32 %v163, %v164
    %v166 = vshll.u32 2475754826, %v160
    %v167 = vshrl.u32 2131351028, %v161
    %v168 = vor.u32 %v166, %v167
    %v169 = vshll.u32 2131351028, %v160
    %v170 = vshrl.u32 2102212464, %v161
    %v171 = vor.u32 %v169, %v170
    %v172 = vshll.u32 2102212464, %v160
    %v173 = vshrl.u32 920167782, %v161
    %v174 = vor.u32 %v172, %v173
    %v175 = vshll.u32 920167782, %v160
    %v176 = vshrl.u32 1326507024, %v161
    %v177 = vor.u32 %v175, %v176
    %vm178 = vcmp.lt.s32.totalorder %v159, 1
    %vm179 = vcmp.lt.s32.totalorder %v159, 2
    %vm180 = vcmp.lt.s32.totalorder %v159, 3
    %vm181 = vcmp.lt.s32.totalorder %v159, 4
    %v182 = vsel %vm178, %v162, %v165
    %v183 = vsel %vm181, %v171, 2102212464
    %v184 = vsel %vm180, %v168, %v183
    %v185 = vsel %vm179, %v182, %v184
    %v186 = vsel %vm178, %v165, %v168
    %v187 = vsel %vm181, %v174, 920167782
    %v188 = vsel %vm180, %v171, %v187
    %v189 = vsel %vm179, %v186, %v188
    %v190 = vsel %vm178, %v168, %v171
    %v191 = vsel %vm181, %v177, 1326507024
    %v192 = vsel %vm180, %v174, %v191
    %v193 = vsel %vm179, %v190, %v192
    %v194 = vshll.u32 %v154, 8
    %v195 = vmul.u32.u64.compose %v194, %v193
    %v196 = vextract.low.u32 %v195
    %v197 = vextract.high.u32 %v195
    %v198 = vmul.u32.u64.compose %v194, %v189
    %v199 = vextract.low.u32 %v198
    %v200 = vextract.high.u32 %v198
    %v201 = vmul.u32 %v194, %v185
    %v202 = vadd.s32 %v197, %v199
    %vm203 = vc.u32 %v197, %v199
    %v204 = vadd.s32 %v200, 1
    %v205 = vsel %vm203, %v204, %v200
    %v206 = vadd.s32 %v201, %v205
    %v207 = vadd.s32 %v206, 536870912
    %v208 = vshrl.u32 %v207, 30
    %v209 = vshll.u32 %v208, 30
    %v210 = vsub.s32 %v206, %v209
    %vm211 = vcmp.lt.s32.totalorder %v210, 0
    %v212 = vsub.s32 0, %v210
    %v213 = vsel %vm211, %v212, %v210
    %v214 = vclz %v213
    %v215 = vsub.s32 %v214, 2
    %vm216 = vcmp.gt.s32.totalorder 0, %v215
    %v217 = vsel %vm216, 0, %v215
    %v218 = vsub.s32 32, %v217
    %v219 = vshll.u32 %v210, %v217
    %v220 = vshrl.u32 %v202, %v218
    %v221 = vor.u32 %v219, %v220
    %v222 = vsub.s32 4294967266, %v217
    %v223 = vadd.s32 %v222, 127
    %v224 = vshll.u32 %v223, 23
    %v225 = vor.u32 4788187, %v224
    %v226 = vand.u32 2147483647, %v225
    %v228 = vcvt.s32.f32 %v221
    %v229 = vmul.f32 %v228, %v226
    %v230 = vxor.u32 %v229, 2147483648
    %v231 = vsel %vm148, %v230, %v229
    %v232 = vsub.s32 4, %v208
    %v233 = vsel %vm148, %v232, %v208
    %v234 = vsel %vm147, %v41, %v231
    %v235 = vsel %vm147, 0, %v233
    %v236 = vcosq.f32.pop %v234
    %v237 = vsinq.f32.pop %v234
    %vm238 = vweird.f32 %v41
    %v239 = vadd.s32 %v235, 3
    %v240 = vand.u32 %v239, 3
    %vm241 = vcmp.lt.s32.totalorder %v240, 2
    %vm242 = vcmp.eq.s32.totalorder %v240, 0
    %v243 = vxor.u32 %v237, 2147483648
    %v244 = vsel %vm242, %v236, %v243
    %vm245 = vcmp.eq.s32.totalorder %v240, 2
    %v246 = vxor.u32 %v236, 2147483648
    %v247 = vsel %vm245, %v246, %v237
    %v248 = vsel %vm241, %v244, %v247
    %v249 = vsel %vm238, nan, %v248
    %v250 = vand.u32 2147483647, %v40
    %vm251 = vcmp.le.f32.partialorder %v250, 0.7853982
    %vm252 = vcmp.lt.s32.totalorder %v40, 0
    %v253 = vand.u32 %v40, 2139095040
    %v254 = vshrl.u32 %v253, 23
    %v255 = vsub.s32 %v254, 127
    %v256 = vand.u32 2147483647, %v40
    %v257 = vand.u32 %v256, 8388607
    %v258 = vor.u32 %v257, 8388608
    %v259 = vsub.s32 0, %v258
    %v260 = vadd.s32 %v255, 1
    %vm261 = vcmp.gt.s32.totalorder %v260, 0
    %v262 = vsel %vm261, %v260, 0
    %v263 = vshrl.u32 %v262, 5
    %v264 = vand.u32 %v262, 31
    %v265 = vsub.s32 32, %v264
    %v266 = vshrl.u32 683565275, %v265
    %v267 = vshll.u32 683565275, %v264
    %v268 = vshrl.u32 2475754826, %v265
    %v269 = vor.u32 %v267, %v268
    %v270 = vshll.u32 2475754826, %v264
    %v271 = vshrl.u32 2131351028, %v265
    %v272 = vor.u32 %v270, %v271
    %v273 = vshll.u32 2131351028, %v264
    %v274 = vshrl.u32 2102212464, %v265
    %v275 = vor.u32 %v273, %v274
    %v276 = vshll.u32 2102212464, %v264
    %v277 = vshrl.u32 920167782, %v265
    %v278 = vor.u32 %v276, %v277
    %v279 = vshll.u32 920167782, %v264
    %v280 = vshrl.u32 1326507024, %v265
    %v281 = vor.u32 %v279, %v280
    %vm282 = vcmp.lt.s32.totalorder %v263, 1
    %vm283 = vcmp.lt.s32.totalorder %v263, 2
    %vm284 = vcmp.lt.s32.totalorder %v263, 3
    %vm285 = vcmp.lt.s32.totalorder %v263, 4
    %v286 = vsel %vm282, %v266, %v269
    %v287 = vsel %vm285, %v275, 2102212464
    %v288 = vsel %vm284, %v272, %v287
    %v289 = vsel %vm283, %v286, %v288
    %v290 = vsel %vm282, %v269, %v272
    %v291 = vsel %vm285, %v278, 920167782
    %v292 = vsel %vm284, %v275, %v291
    %v293 = vsel %vm283, %v290, %v292
    %v294 = vsel %vm282, %v272, %v275
    %v295 = vsel %vm285, %v281, 1326507024
    %v296 = vsel %vm284, %v278, %v295
    %v297 = vsel %vm283, %v294, %v296
    %v298 = vshll.u32 %v258, 8
    %v299 = vmul.u32.u64.compose %v298, %v297
    %v300 = vextract.low.u32 %v299
    %v301 = vextract.high.u32 %v299
    %v302 = vmul.u32.u64.compose %v298, %v293
    %v303 = vextract.low.u32 %v302
    %v304 = vextract.high.u32 %v302
    %v305 = vmul.u32 %v298, %v289
    %v306 = vadd.s32 %v301, %v303
    %vm307 = vc.u32 %v301, %v303
    %v308 = vadd.s32 %v304, 1
    %v309 = vsel %vm307, %v308, %v304
    %v310 = vadd.s32 %v305, %v309
    %v311 = vadd.s32 %v310, 536870912
    %v312 = vshrl.u32 %v311, 30
    %v313 = vshll.u32 %v312, 30
    %v314 = vsub.s32 %v310, %v313
    %vm315 = vcmp.lt.s32.totalorder %v314, 0
    %v316 = vsub.s32 0, %v314
    %v317 = vsel %vm315, %v316, %v314
    %v318 = vclz %v317
    %v319 = vsub.s32 %v318, 2
    %vm320 = vcmp.gt.s32.totalorder 0, %v319
    %v321 = vsel %vm320, 0, %v319
    %v322 = vsub.s32 32, %v321
    %v323 = vshll.u32 %v314, %v321
    %v324 = vshrl.u32 %v306, %v322
    %v325 = vor.u32 %v323, %v324
    %v326 = vsub.s32 4294967266, %v321
    %v327 = vadd.s32 %v326, 127
    %v328 = vshll.u32 %v327, 23
    %v329 = vor.u32 4788187, %v328
    %v330 = vand.u32 2147483647, %v329
    %v332 = vcvt.s32.f32 %v325
    %v333 = vmul.f32 %v332, %v330
    %v334 = vxor.u32 %v333, 2147483648
    %v335 = vsel %vm252, %v334, %v333
    %v336 = vsub.s32 4, %v312
    %v337 = vsel %vm252, %v336, %v312
    %v338 = vsel %vm251, %v40, %v335
    %v339 = vsel %vm251, 0, %v337
    %v340 = vcosq.f32.pop %v338
    %v341 = vsinq.f32.pop %v338
    %vm342 = vweird.f32 %v40
    %v343 = vand.u32 %v339, 3
    %vm344 = vcmp.lt.s32.totalorder %v343, 2
    %vm345 = vcmp.eq.s32.totalorder %v343, 0
    %v346 = vxor.u32 %v341, 2147483648
    %v347 = vsel %vm345, %v340, %v346
    %vm348 = vcmp.eq.s32.totalorder %v343, 2
    %v349 = vxor.u32 %v340, 2147483648
    %v350 = vsel %vm348, %v349, %v341
    %v351 = vsel %vm344, %v347, %v350
    %v352 = vsel %vm342, nan, %v351
    %v353 = vand.u32 2147483647, %v41
    %vm354 = vcmp.le.f32.partialorder %v353, 0.7853982
    %vm355 = vcmp.lt.s32.totalorder %v41, 0
    %v356 = vand.u32 %v41, 2139095040
    %v357 = vshrl.u32 %v356, 23
    %v358 = vsub.s32 %v357, 127
    %v359 = vand.u32 2147483647, %v41
    %v360 = vand.u32 %v359, 8388607
    %v361 = vor.u32 %v360, 8388608
    %v362 = vsub.s32 0, %v361
    %v363 = vadd.s32 %v358, 1
    %vm364 = vcmp.gt.s32.totalorder %v363, 0
    %v365 = vsel %vm364, %v363, 0
    %v366 = vshrl.u32 %v365, 5
    %v367 = vand.u32 %v365, 31
    %v368 = vsub.s32 32, %v367
    %v369 = vshrl.u32 683565275, %v368
    %v370 = vshll.u32 683565275, %v367
    %v371 = vshrl.u32 2475754826, %v368
    %v372 = vor.u32 %v370, %v371
    %v373 = vshll.u32 2475754826, %v367
    %v374 = vshrl.u32 2131351028, %v368
    %v375 = vor.u32 %v373, %v374
    %v376 = vshll.u32 2131351028, %v367
    %v377 = vshrl.u32 2102212464, %v368
    %v378 = vor.u32 %v376, %v377
    %v379 = vshll.u32 2102212464, %v367
    %v380 = vshrl.u32 920167782, %v368
    %v381 = vor.u32 %v379, %v380
    %v382 = vshll.u32 920167782, %v367
    %v383 = vshrl.u32 1326507024, %v368
    %v384 = vor.u32 %v382, %v383
    %vm385 = vcmp.lt.s32.totalorder %v366, 1
    %vm386 = vcmp.lt.s32.totalorder %v366, 2
    %vm387 = vcmp.lt.s32.totalorder %v366, 3
    %vm388 = vcmp.lt.s32.totalorder %v366, 4
    %v389 = vsel %vm385, %v369, %v372
    %v390 = vsel %vm388, %v378, 2102212464
    %v391 = vsel %vm387, %v375, %v390
    %v392 = vsel %vm386, %v389, %v391
    %v393 = vsel %vm385, %v372, %v375
    %v394 = vsel %vm388, %v381, 920167782
    %v395 = vsel %vm387, %v378, %v394
    %v396 = vsel %vm386, %v393, %v395
    %v397 = vsel %vm385, %v375, %v378
    %v398 = vsel %vm388, %v384, 1326507024
    %v399 = vsel %vm387, %v381, %v398
    %v400 = vsel %vm386, %v397, %v399
    %v401 = vshll.u32 %v361, 8
    %v402 = vmul.u32.u64.compose %v401, %v400
    %v403 = vextract.low.u32 %v402
    %v404 = vextract.high.u32 %v402
    %v405 = vmul.u32.u64.compose %v401, %v396
    %v406 = vextract.low.u32 %v405
    %v407 = vextract.high.u32 %v405
    %v408 = vmul.u32 %v401, %v392
    %v409 = vadd.s32 %v404, %v406
    %vm410 = vc.u32 %v404, %v406
    %v411 = vadd.s32 %v407, 1
    %v412 = vsel %vm410, %v411, %v407
    %v413 = vadd.s32 %v408, %v412
    %v414 = vadd.s32 %v413, 536870912
    %v415 = vshrl.u32 %v414, 30
    %v416 = vshll.u32 %v415, 30
    %v417 = vsub.s32 %v413, %v416
    %vm418 = vcmp.lt.s32.totalorder %v417, 0
    %v419 = vsub.s32 0, %v417
    %v420 = vsel %vm418, %v419, %v417
    %v421 = vclz %v420
    %v422 = vsub.s32 %v421, 2
    %vm423 = vcmp.gt.s32.totalorder 0, %v422
    %v424 = vsel %vm423, 0, %v422
    %v425 = vsub.s32 32, %v424
    %v426 = vshll.u32 %v417, %v424
    %v427 = vshrl.u32 %v409, %v425
    %v428 = vor.u32 %v426, %v427
    %v429 = vsub.s32 4294967266, %v424
    %v430 = vadd.s32 %v429, 127
    %v431 = vshll.u32 %v430, 23
    %v432 = vor.u32 4788187, %v431
    %v433 = vand.u32 2147483647, %v432
    %v435 = vcvt.s32.f32 %v428
    %v436 = vmul.f32 %v435, %v433
    %v437 = vxor.u32 %v436, 2147483648
    %v438 = vsel %vm355, %v437, %v436
    %v439 = vsub.s32 4, %v415
    %v440 = vsel %vm355, %v439, %v415
    %v441 = vsel %vm354, %v41, %v438
    %v442 = vsel %vm354, 0, %v440
    %v443 = vcosq.f32.pop %v441
    %v444 = vsinq.f32.pop %v441
    %vm445 = vweird.f32 %v41
    %v446 = vand.u32 %v442, 3
    %vm447 = vcmp.lt.s32.totalorder %v446, 2
    %vm448 = vcmp.eq.s32.totalorder %v446, 0
    %v449 = vxor.u32 %v444, 2147483648
    %v450 = vsel %vm448, %v443, %v449
    %vm451 = vcmp.eq.s32.totalorder %v446, 2
    %v452 = vxor.u32 %v443, 2147483648
    %v453 = vsel %vm451, %v452, %v444
    %v454 = vsel %vm447, %v450, %v453
    %v455 = vsel %vm445, nan, %v454
    %v456 = vmul.f32 %v145, %v34
    %v457 = vmul.f32 %v249, %v36
    %458 = vst.msk [vmem:[%s1 + $0x10] sm:$0xff] %vm37, %v456
    %459 = vst.msk [vmem:[%s1 + $0x18] sm:$0xff] %vm37, %v457
    %v460 = vmul.f32 %v352, %v34
    %v461 = vmul.f32 %v455, %v36
    %462 = vst.msk [vmem:[%s1 + $0x20] sm:$0xff] %vm37, %v460
    %463 = vst.msk [vmem:[%s1 + $0x28] sm:$0xff] %vm37, %v461
    %v464 = vmul.f32 %v145, 2.0
    %v465 = vmul.f32 %v249, 2.0
    %v466 = vmul.f32 %v464, %v352
    %v467 = vmul.f32 %v465, %v455
    %v468 = vmul.f32 %v352, 2.0
    %v469 = vmul.f32 %v455, 2.0
    %v470 = vmul.f32 %v468, %v352
    %v471 = vmul.f32 %v469, %v455
    %v472 = vsub.f32 %v470, 1.0
    %v473 = vsub.f32 %v471, 1.0
    %v474 = vmul.f32 %v466, %v34
    %v475 = vmul.f32 %v467, %v36
    %476 = vst.msk [vmem:[%s1 + $0x30] sm:$0xff] %vm37, %v474
    %477 = vst.msk [vmem:[%s1 + $0x38] sm:$0xff] %vm37, %v475
    %v478 = vmul.f32 %v472, %v34
    %v479 = vmul.f32 %v473, %v36
    %480 = vst.msk [vmem:[%s1 + $0x40] sm:$0xff] %vm37, %v478
    %481 = vst.msk [vmem:[%s1 + $0x48] sm:$0xff] %vm37, %v479
    %v482 = vmul.f32 %v466, 2.0
    %v483 = vmul.f32 %v467, 2.0
    %v484 = vmul.f32 %v482, %v472
    %v485 = vmul.f32 %v483, %v473
    %v486 = vmul.f32 %v472, 2.0
    %v487 = vmul.f32 %v473, 2.0
    %v488 = vmul.f32 %v486, %v472
    %v489 = vmul.f32 %v487, %v473
    %v490 = vsub.f32 %v488, 1.0
    %v491 = vsub.f32 %v489, 1.0
    %v492 = vmul.f32 %v484, %v34
    %v493 = vmul.f32 %v485, %v36
    %494 = vst.msk [vmem:[%s1 + $0x50] sm:$0xff] %vm37, %v492
    %495 = vst.msk [vmem:[%s1 + $0x58] sm:$0xff] %vm37, %v493
    %v496 = vmul.f32 %v490, %v34
    %v497 = vmul.f32 %v491, %v36
    %498 = vst.msk [vmem:[%s1 + $0x60] sm:$0xff] %vm37, %v496
    %499 = vst.msk [vmem:[%s1 + $0x68] sm:$0xff] %vm37, %v497
    %v500 = vmul.f32 %v40, 8.0
    %v501 = vmul.f32 %v41, 8.0
    %v502 = vand.u32 2147483647, %v500
    %vm503 = vcmp.le.f32.partialorder %v502, 0.7853982
    %vm504 = vcmp.lt.s32.totalorder %v500, 0
    %v505 = vand.u32 %v500, 2139095040
    %v506 = vshrl.u32 %v505, 23
    %v507 = vsub.s32 %v506, 127
    %v508 = vand.u32 2147483647, %v500
    %v509 = vand.u32 %v508, 8388607
    %v510 = vor.u32 %v509, 8388608
    %v511 = vsub.s32 0, %v510
    %v512 = vadd.s32 %v507, 1
    %vm513 = vcmp.gt.s32.totalorder %v512, 0
    %v514 = vsel %vm513, %v512, 0
    %v515 = vshrl.u32 %v514, 5
    %v516 = vand.u32 %v514, 31
    %v517 = vsub.s32 32, %v516
    %v518 = vshrl.u32 683565275, %v517
    %v519 = vshll.u32 683565275, %v516
    %v520 = vshrl.u32 2475754826, %v517
    %v521 = vor.u32 %v519, %v520
    %v522 = vshll.u32 2475754826, %v516
    %v523 = vshrl.u32 2131351028, %v517
    %v524 = vor.u32 %v522, %v523
    %v525 = vshll.u32 2131351028, %v516
    %v526 = vshrl.u32 2102212464, %v517
    %v527 = vor.u32 %v525, %v526
    %v528 = vshll.u32 2102212464, %v516
    %v529 = vshrl.u32 920167782, %v517
    %v530 = vor.u32 %v528, %v529
    %v531 = vshll.u32 920167782, %v516
    %v532 = vshrl.u32 1326507024, %v517
    %v533 = vor.u32 %v531, %v532
    %vm534 = vcmp.lt.s32.totalorder %v515, 1
    %vm535 = vcmp.lt.s32.totalorder %v515, 2
    %vm536 = vcmp.lt.s32.totalorder %v515, 3
    %vm537 = vcmp.lt.s32.totalorder %v515, 4
    %v538 = vsel %vm534, %v518, %v521
    %v539 = vsel %vm537, %v527, 2102212464
    %v540 = vsel %vm536, %v524, %v539
    %v541 = vsel %vm535, %v538, %v540
    %v542 = vsel %vm534, %v521, %v524
    %v543 = vsel %vm537, %v530, 920167782
    %v544 = vsel %vm536, %v527, %v543
    %v545 = vsel %vm535, %v542, %v544
    %v546 = vsel %vm534, %v524, %v527
    %v547 = vsel %vm537, %v533, 1326507024
    %v548 = vsel %vm536, %v530, %v547
    %v549 = vsel %vm535, %v546, %v548
    %v550 = vshll.u32 %v510, 8
    %v551 = vmul.u32.u64.compose %v550, %v549
    %v552 = vextract.low.u32 %v551
    %v553 = vextract.high.u32 %v551
    %v554 = vmul.u32.u64.compose %v550, %v545
    %v555 = vextract.low.u32 %v554
    %v556 = vextract.high.u32 %v554
    %v557 = vmul.u32 %v550, %v541
    %v558 = vadd.s32 %v553, %v555
    %vm559 = vc.u32 %v553, %v555
    %v560 = vadd.s32 %v556, 1
    %v561 = vsel %vm559, %v560, %v556
    %v562 = vadd.s32 %v557, %v561
    %v563 = vadd.s32 %v562, 536870912
    %v564 = vshrl.u32 %v563, 30
    %v565 = vshll.u32 %v564, 30
    %v566 = vsub.s32 %v562, %v565
    %vm567 = vcmp.lt.s32.totalorder %v566, 0
    %v568 = vsub.s32 0, %v566
    %v569 = vsel %vm567, %v568, %v566
    %v570 = vclz %v569
    %v571 = vsub.s32 %v570, 2
    %vm572 = vcmp.gt.s32.totalorder 0, %v571
    %v573 = vsel %vm572, 0, %v571
    %v574 = vsub.s32 32, %v573
    %v575 = vshll.u32 %v566, %v573
    %v576 = vshrl.u32 %v558, %v574
    %v577 = vor.u32 %v575, %v576
    %v578 = vsub.s32 4294967266, %v573
    %v579 = vadd.s32 %v578, 127
    %v580 = vshll.u32 %v579, 23
    %v581 = vor.u32 4788187, %v580
    %v582 = vand.u32 2147483647, %v581
    %v584 = vcvt.s32.f32 %v577
    %v585 = vmul.f32 %v584, %v582
    %v586 = vxor.u32 %v585, 2147483648
    %v587 = vsel %vm504, %v586, %v585
    %v588 = vsub.s32 4, %v564
    %v589 = vsel %vm504, %v588, %v564
    %v590 = vsel %vm503, %v500, %v587
    %v591 = vsel %vm503, 0, %v589
    %v592 = vcosq.f32.pop %v590
    %v593 = vsinq.f32.pop %v590
    %vm594 = vweird.f32 %v500
    %v595 = vadd.s32 %v591, 3
    %v596 = vand.u32 %v595, 3
    %vm597 = vcmp.lt.s32.totalorder %v596, 2
    %vm598 = vcmp.eq.s32.totalorder %v596, 0
    %v599 = vxor.u32 %v593, 2147483648
    %v600 = vsel %vm598, %v592, %v599
    %vm601 = vcmp.eq.s32.totalorder %v596, 2
    %v602 = vxor.u32 %v592, 2147483648
    %v603 = vsel %vm601, %v602, %v593
    %v604 = vsel %vm597, %v600, %v603
    %v605 = vsel %vm594, nan, %v604
    %v606 = vand.u32 2147483647, %v501
    %vm607 = vcmp.le.f32.partialorder %v606, 0.7853982
    %vm608 = vcmp.lt.s32.totalorder %v501, 0
    %v609 = vand.u32 %v501, 2139095040
    %v610 = vshrl.u32 %v609, 23
    %v611 = vsub.s32 %v610, 127
    %v612 = vand.u32 2147483647, %v501
    %v613 = vand.u32 %v612, 8388607
    %v614 = vor.u32 %v613, 8388608
    %v615 = vsub.s32 0, %v614
    %v616 = vadd.s32 %v611, 1
    %vm617 = vcmp.gt.s32.totalorder %v616, 0
    %v618 = vsel %vm617, %v616, 0
    %v619 = vshrl.u32 %v618, 5
    %v620 = vand.u32 %v618, 31
    %v621 = vsub.s32 32, %v620
    %v622 = vshrl.u32 683565275, %v621
    %v623 = vshll.u32 683565275, %v620
    %v624 = vshrl.u32 2475754826, %v621
    %v625 = vor.u32 %v623, %v624
    %v626 = vshll.u32 2475754826, %v620
    %v627 = vshrl.u32 2131351028, %v621
    %v628 = vor.u32 %v626, %v627
    %v629 = vshll.u32 2131351028, %v620
    %v630 = vshrl.u32 2102212464, %v621
    %v631 = vor.u32 %v629, %v630
    %v632 = vshll.u32 2102212464, %v620
    %v633 = vshrl.u32 920167782, %v621
    %v634 = vor.u32 %v632, %v633
    %v635 = vshll.u32 920167782, %v620
    %v636 = vshrl.u32 1326507024, %v621
    %v637 = vor.u32 %v635, %v636
    %vm638 = vcmp.lt.s32.totalorder %v619, 1
    %vm639 = vcmp.lt.s32.totalorder %v619, 2
    %vm640 = vcmp.lt.s32.totalorder %v619, 3
    %vm641 = vcmp.lt.s32.totalorder %v619, 4
    %v642 = vsel %vm638, %v622, %v625
    %v643 = vsel %vm641, %v631, 2102212464
    %v644 = vsel %vm640, %v628, %v643
    %v645 = vsel %vm639, %v642, %v644
    %v646 = vsel %vm638, %v625, %v628
    %v647 = vsel %vm641, %v634, 920167782
    %v648 = vsel %vm640, %v631, %v647
    %v649 = vsel %vm639, %v646, %v648
    %v650 = vsel %vm638, %v628, %v631
    %v651 = vsel %vm641, %v637, 1326507024
    %v652 = vsel %vm640, %v634, %v651
    %v653 = vsel %vm639, %v650, %v652
    %v654 = vshll.u32 %v614, 8
    %v655 = vmul.u32.u64.compose %v654, %v653
    %v656 = vextract.low.u32 %v655
    %v657 = vextract.high.u32 %v655
    %v658 = vmul.u32.u64.compose %v654, %v649
    %v659 = vextract.low.u32 %v658
    %v660 = vextract.high.u32 %v658
    %v661 = vmul.u32 %v654, %v645
    %v662 = vadd.s32 %v657, %v659
    %vm663 = vc.u32 %v657, %v659
    %v664 = vadd.s32 %v660, 1
    %v665 = vsel %vm663, %v664, %v660
    %v666 = vadd.s32 %v661, %v665
    %v667 = vadd.s32 %v666, 536870912
    %v668 = vshrl.u32 %v667, 30
    %v669 = vshll.u32 %v668, 30
    %v670 = vsub.s32 %v666, %v669
    %vm671 = vcmp.lt.s32.totalorder %v670, 0
    %v672 = vsub.s32 0, %v670
    %v673 = vsel %vm671, %v672, %v670
    %v674 = vclz %v673
    %v675 = vsub.s32 %v674, 2
    %vm676 = vcmp.gt.s32.totalorder 0, %v675
    %v677 = vsel %vm676, 0, %v675
    %v678 = vsub.s32 32, %v677
    %v679 = vshll.u32 %v670, %v677
    %v680 = vshrl.u32 %v662, %v678
    %v681 = vor.u32 %v679, %v680
    %v682 = vsub.s32 4294967266, %v677
    %v683 = vadd.s32 %v682, 127
    %v684 = vshll.u32 %v683, 23
    %v685 = vor.u32 4788187, %v684
    %v686 = vand.u32 2147483647, %v685
    %v688 = vcvt.s32.f32 %v681
    %v689 = vmul.f32 %v688, %v686
    %v690 = vxor.u32 %v689, 2147483648
    %v691 = vsel %vm608, %v690, %v689
    %v692 = vsub.s32 4, %v668
    %v693 = vsel %vm608, %v692, %v668
    %v694 = vsel %vm607, %v501, %v691
    %v695 = vsel %vm607, 0, %v693
    %v696 = vcosq.f32.pop %v694
    %v697 = vsinq.f32.pop %v694
    %vm698 = vweird.f32 %v501
    %v699 = vadd.s32 %v695, 3
    %v700 = vand.u32 %v699, 3
    %vm701 = vcmp.lt.s32.totalorder %v700, 2
    %vm702 = vcmp.eq.s32.totalorder %v700, 0
    %v703 = vxor.u32 %v697, 2147483648
    %v704 = vsel %vm702, %v696, %v703
    %vm705 = vcmp.eq.s32.totalorder %v700, 2
    %v706 = vxor.u32 %v696, 2147483648
    %v707 = vsel %vm705, %v706, %v697
    %v708 = vsel %vm701, %v704, %v707
    %v709 = vsel %vm698, nan, %v708
    %v710 = vand.u32 2147483647, %v500
    %vm711 = vcmp.le.f32.partialorder %v710, 0.7853982
    %vm712 = vcmp.lt.s32.totalorder %v500, 0
    %v713 = vand.u32 %v500, 2139095040
    %v714 = vshrl.u32 %v713, 23
    %v715 = vsub.s32 %v714, 127
    %v716 = vand.u32 2147483647, %v500
    %v717 = vand.u32 %v716, 8388607
    %v718 = vor.u32 %v717, 8388608
    %v719 = vsub.s32 0, %v718
    %v720 = vadd.s32 %v715, 1
    %vm721 = vcmp.gt.s32.totalorder %v720, 0
    %v722 = vsel %vm721, %v720, 0
    %v723 = vshrl.u32 %v722, 5
    %v724 = vand.u32 %v722, 31
    %v725 = vsub.s32 32, %v724
    %v726 = vshrl.u32 683565275, %v725
    %v727 = vshll.u32 683565275, %v724
    %v728 = vshrl.u32 2475754826, %v725
    %v729 = vor.u32 %v727, %v728
    %v730 = vshll.u32 2475754826, %v724
    %v731 = vshrl.u32 2131351028, %v725
    %v732 = vor.u32 %v730, %v731
    %v733 = vshll.u32 2131351028, %v724
    %v734 = vshrl.u32 2102212464, %v725
    %v735 = vor.u32 %v733, %v734
    %v736 = vshll.u32 2102212464, %v724
    %v737 = vshrl.u32 920167782, %v725
    %v738 = vor.u32 %v736, %v737
    %v739 = vshll.u32 920167782, %v724
    %v740 = vshrl.u32 1326507024, %v725
    %v741 = vor.u32 %v739, %v740
    %vm742 = vcmp.lt.s32.totalorder %v723, 1
    %vm743 = vcmp.lt.s32.totalorder %v723, 2
    %vm744 = vcmp.lt.s32.totalorder %v723, 3
    %vm745 = vcmp.lt.s32.totalorder %v723, 4
    %v746 = vsel %vm742, %v726, %v729
    %v747 = vsel %vm745, %v735, 2102212464
    %v748 = vsel %vm744, %v732, %v747
    %v749 = vsel %vm743, %v746, %v748
    %v750 = vsel %vm742, %v729, %v732
    %v751 = vsel %vm745, %v738, 920167782
    %v752 = vsel %vm744, %v735, %v751
    %v753 = vsel %vm743, %v750, %v752
    %v754 = vsel %vm742, %v732, %v735
    %v755 = vsel %vm745, %v741, 1326507024
    %v756 = vsel %vm744, %v738, %v755
    %v757 = vsel %vm743, %v754, %v756
    %v758 = vshll.u32 %v718, 8
    %v759 = vmul.u32.u64.compose %v758, %v757
    %v760 = vextract.low.u32 %v759
    %v761 = vextract.high.u32 %v759
    %v762 = vmul.u32.u64.compose %v758, %v753
    %v763 = vextract.low.u32 %v762
    %v764 = vextract.high.u32 %v762
    %v765 = vmul.u32 %v758, %v749
    %v766 = vadd.s32 %v761, %v763
    %vm767 = vc.u32 %v761, %v763
    %v768 = vadd.s32 %v764, 1
    %v769 = vsel %vm767, %v768, %v764
    %v770 = vadd.s32 %v765, %v769
    %v771 = vadd.s32 %v770, 536870912
    %v772 = vshrl.u32 %v771, 30
    %v773 = vshll.u32 %v772, 30
    %v774 = vsub.s32 %v770, %v773
    %vm775 = vcmp.lt.s32.totalorder %v774, 0
    %v776 = vsub.s32 0, %v774
    %v777 = vsel %vm775, %v776, %v774
    %v778 = vclz %v777
    %v779 = vsub.s32 %v778, 2
    %vm780 = vcmp.gt.s32.totalorder 0, %v779
    %v781 = vsel %vm780, 0, %v779
    %v782 = vsub.s32 32, %v781
    %v783 = vshll.u32 %v774, %v781
    %v784 = vshrl.u32 %v766, %v782
    %v785 = vor.u32 %v783, %v784
    %v786 = vsub.s32 4294967266, %v781
    %v787 = vadd.s32 %v786, 127
    %v788 = vshll.u32 %v787, 23
    %v789 = vor.u32 4788187, %v788
    %v790 = vand.u32 2147483647, %v789
    %v792 = vcvt.s32.f32 %v785
    %v793 = vmul.f32 %v792, %v790
    %v794 = vxor.u32 %v793, 2147483648
    %v795 = vsel %vm712, %v794, %v793
    %v796 = vsub.s32 4, %v772
    %v797 = vsel %vm712, %v796, %v772
    %v798 = vsel %vm711, %v500, %v795
    %v799 = vsel %vm711, 0, %v797
    %v800 = vcosq.f32.pop %v798
    %v801 = vsinq.f32.pop %v798
    %vm802 = vweird.f32 %v500
    %v803 = vand.u32 %v799, 3
    %vm804 = vcmp.lt.s32.totalorder %v803, 2
    %vm805 = vcmp.eq.s32.totalorder %v803, 0
    %v806 = vxor.u32 %v801, 2147483648
    %v807 = vsel %vm805, %v800, %v806
    %vm808 = vcmp.eq.s32.totalorder %v803, 2
    %v809 = vxor.u32 %v800, 2147483648
    %v810 = vsel %vm808, %v809, %v801
    %v811 = vsel %vm804, %v807, %v810
    %v812 = vsel %vm802, nan, %v811
    %v813 = vand.u32 2147483647, %v501
    %vm814 = vcmp.le.f32.partialorder %v813, 0.7853982
    %vm815 = vcmp.lt.s32.totalorder %v501, 0
    %v816 = vand.u32 %v501, 2139095040
    %v817 = vshrl.u32 %v816, 23
    %v818 = vsub.s32 %v817, 127
    %v819 = vand.u32 2147483647, %v501
    %v820 = vand.u32 %v819, 8388607
    %v821 = vor.u32 %v820, 8388608
    %v822 = vsub.s32 0, %v821
    %v823 = vadd.s32 %v818, 1
    %vm824 = vcmp.gt.s32.totalorder %v823, 0
    %v825 = vsel %vm824, %v823, 0
    %v826 = vshrl.u32 %v825, 5
    %v827 = vand.u32 %v825, 31
    %v828 = vsub.s32 32, %v827
    %v829 = vshrl.u32 683565275, %v828
    %v830 = vshll.u32 683565275, %v827
    %v831 = vshrl.u32 2475754826, %v828
    %v832 = vor.u32 %v830, %v831
    %v833 = vshll.u32 2475754826, %v827
    %v834 = vshrl.u32 2131351028, %v828
    %v835 = vor.u32 %v833, %v834
    %v836 = vshll.u32 2131351028, %v827
    %v837 = vshrl.u32 2102212464, %v828
    %v838 = vor.u32 %v836, %v837
    %v839 = vshll.u32 2102212464, %v827
    %v840 = vshrl.u32 920167782, %v828
    %v841 = vor.u32 %v839, %v840
    %v842 = vshll.u32 920167782, %v827
    %v843 = vshrl.u32 1326507024, %v828
    %v844 = vor.u32 %v842, %v843
    %vm845 = vcmp.lt.s32.totalorder %v826, 1
    %vm846 = vcmp.lt.s32.totalorder %v826, 2
    %vm847 = vcmp.lt.s32.totalorder %v826, 3
    %vm848 = vcmp.lt.s32.totalorder %v826, 4
    %v849 = vsel %vm845, %v829, %v832
    %v850 = vsel %vm848, %v838, 2102212464
    %v851 = vsel %vm847, %v835, %v850
    %v852 = vsel %vm846, %v849, %v851
    %v853 = vsel %vm845, %v832, %v835
    %v854 = vsel %vm848, %v841, 920167782
    %v855 = vsel %vm847, %v838, %v854
    %v856 = vsel %vm846, %v853, %v855
    %v857 = vsel %vm845, %v835, %v838
    %v858 = vsel %vm848, %v844, 1326507024
    %v859 = vsel %vm847, %v841, %v858
    %v860 = vsel %vm846, %v857, %v859
    %v861 = vshll.u32 %v821, 8
    %v862 = vmul.u32.u64.compose %v861, %v860
    %v863 = vextract.low.u32 %v862
    %v864 = vextract.high.u32 %v862
    %v865 = vmul.u32.u64.compose %v861, %v856
    %v866 = vextract.low.u32 %v865
    %v867 = vextract.high.u32 %v865
    %v868 = vmul.u32 %v861, %v852
    %v869 = vadd.s32 %v864, %v866
    %vm870 = vc.u32 %v864, %v866
    %v871 = vadd.s32 %v867, 1
    %v872 = vsel %vm870, %v871, %v867
    %v873 = vadd.s32 %v868, %v872
    %v874 = vadd.s32 %v873, 536870912
    %v875 = vshrl.u32 %v874, 30
    %v876 = vshll.u32 %v875, 30
    %v877 = vsub.s32 %v873, %v876
    %vm878 = vcmp.lt.s32.totalorder %v877, 0
    %v879 = vsub.s32 0, %v877
    %v880 = vsel %vm878, %v879, %v877
    %v881 = vclz %v880
    %v882 = vsub.s32 %v881, 2
    %vm883 = vcmp.gt.s32.totalorder 0, %v882
    %v884 = vsel %vm883, 0, %v882
    %v885 = vsub.s32 32, %v884
    %v886 = vshll.u32 %v877, %v884
    %v887 = vshrl.u32 %v869, %v885
    %v888 = vor.u32 %v886, %v887
    %v889 = vsub.s32 4294967266, %v884
    %v890 = vadd.s32 %v889, 127
    %v891 = vshll.u32 %v890, 23
    %v892 = vor.u32 4788187, %v891
    %v893 = vand.u32 2147483647, %v892
    %v895 = vcvt.s32.f32 %v888
    %v896 = vmul.f32 %v895, %v893
    %v897 = vxor.u32 %v896, 2147483648
    %v898 = vsel %vm815, %v897, %v896
    %v899 = vsub.s32 4, %v875
    %v900 = vsel %vm815, %v899, %v875
    %v901 = vsel %vm814, %v501, %v898
    %v902 = vsel %vm814, 0, %v900
    %v903 = vcosq.f32.pop %v901
    %v904 = vsinq.f32.pop %v901
    %vm905 = vweird.f32 %v501
    %v906 = vand.u32 %v902, 3
    %vm907 = vcmp.lt.s32.totalorder %v906, 2
    %vm908 = vcmp.eq.s32.totalorder %v906, 0
    %v909 = vxor.u32 %v904, 2147483648
    %v910 = vsel %vm908, %v903, %v909
    %vm911 = vcmp.eq.s32.totalorder %v906, 2
    %v912 = vxor.u32 %v903, 2147483648
    %v913 = vsel %vm911, %v912, %v904
    %v914 = vsel %vm907, %v910, %v913
    %v915 = vsel %vm905, nan, %v914
    %v916 = vmul.f32 %v605, %v34
    %v917 = vmul.f32 %v709, %v36
    %918 = vst.msk [vmem:[%s1 + $0x70] sm:$0xff] %vm37, %v916
    %919 = vst.msk [vmem:[%s1 + $0x78] sm:$0xff] %vm37, %v917
    %v920 = vmul.f32 %v812, %v34
    %v921 = vmul.f32 %v915, %v36
    %922 = vst.msk [vmem:[%s1 + $0x80] sm:$0xff] %vm37, %v920
    %923 = vst.msk [vmem:[%s1 + $0x88] sm:$0xff] %vm37, %v921
    %v924 = vmul.f32 %v605, 2.0
    %v925 = vmul.f32 %v709, 2.0
    %v926 = vmul.f32 %v924, %v812
    %v927 = vmul.f32 %v925, %v915
    %v928 = vmul.f32 %v812, 2.0
    %v929 = vmul.f32 %v915, 2.0
    %v930 = vmul.f32 %v928, %v812
    %v931 = vmul.f32 %v929, %v915
    %v932 = vsub.f32 %v930, 1.0
    %v933 = vsub.f32 %v931, 1.0
    %v934 = vmul.f32 %v926, %v34
    %v935 = vmul.f32 %v927, %v36
    %936 = vst.msk [vmem:[%s1 + $0x90] sm:$0xff] %vm37, %v934
    %937 = vst.msk [vmem:[%s1 + $0x98] sm:$0xff] %vm37, %v935
    %v938 = vmul.f32 %v932, %v34
    %v939 = vmul.f32 %v933, %v36
    %940 = vst.msk [vmem:[%s1 + $0xa0] sm:$0xff] %vm37, %v938
    %941 = vst.msk [vmem:[%s1 + $0xa8] sm:$0xff] %vm37, %v939
    // Predicated region
    $region10: #{tpu_custom_call.1} parent=1 // pred_check
      _
    $region11: #{tpu_custom_call.1} parent=1 // pred_check_branch
      %943 = sbr.rel (0) target = $region13
    $region12: #{tpu_custom_call.1} parent=1 // pred_region
      _
    $region13: #{tpu_custom_call.1} parent=1 // pred_fallthru
      _
    // Predicated region
    $region14: #{tpu_custom_call.1} parent=1 // pred_check
      _
    $region15: #{tpu_custom_call.1} parent=1 // pred_check_branch
      %945 = sbr.rel (0) target = $region17
    $region16: #{tpu_custom_call.1} parent=1 // pred_region
      _
    $region17: #{tpu_custom_call.1} parent=1 // pred_fallthru
      _
    %946 = vsyncpa [#allocation3], 1

</llo_original>
